<compile_context>
chip_gen: v7x
topology: tpu7x:2x2x1
jax: 0.10.0
libtpu: 0.0.40
codegen_flags: <defaults>
</compile_context>

<pallas_src>
import functools
import math

import numpy as np
import jax
import jax.numpy as jnp
from jax import lax
from jax.experimental import pallas as pl
from jax.experimental.pallas import tpu as pltpu


LANE = 128            # vreg lane width
SUB_ROWS = 8          # rows per inner sub-tile (caps live vregs ~48 < 64)
MAX_BLOCK_ROWS = 256  # (256,128) f32 block = 128 KiB; ~0.5 MiB double-buffered


# ---------------------------------------------------------------------------
# Host-side "parameter initialization": build a finalized t-digest in float64,
# faithfully following TDigest.add_centroids / _process / finalize.  This is
# the state that apply_stats() would have installed on the module.
# ---------------------------------------------------------------------------
def _integrated_q(k, compression, pi):
    return (1.0 + math.sin(min(k, compression) * pi / compression - pi / 2.0)) / 2.0


def _integrated_location(q, compression, pi):
    return (math.asin(2.0 * q - 1.0) + pi / 2.0) * compression / pi


def build_finalized_digest(data, compression):
    pi = math.pi
    means_u = np.asarray(data, dtype=np.float64)
    weights_u = np.ones_like(means_u)

    # add_centroids buffers everything (len(data) <= 8*ceil(compression)), so a
    # single _process pass happens at finalize(), exactly as in the torch code.
    assert means_u.shape[0] <= int(math.ceil(compression)) * 8

    order = np.argsort(means_u)
    pm = [float(means_u[order[0]])]
    pw = [float(weights_u[order[0]])]
    processed_weight = float(weights_u.sum())
    weight_acc = 0.0
    limit = processed_weight * _integrated_q(1.0, compression, pi)
    for i in order[1:]:
        mean = float(means_u[i])
        weight = float(weights_u[i])
        proj = weight_acc + weight
        if proj <= limit:
            weight_acc = proj
            pw[-1] += weight
            delta = weight * (mean - pm[-1]) / pw[-1]
            if math.isnan(delta):
                delta = 0.0
            pm[-1] += delta
        else:
            k1 = _integrated_location(weight_acc / processed_weight, compression, pi)
            limit = processed_weight * _integrated_q(k1 + 1.0, compression, pi)
            weight_acc += weight
            pm.append(mean)
            pw.append(weight)
    pm = np.asarray(pm, dtype=np.float64)
    pw = np.asarray(pw, dtype=np.float64)
    mean_min = min(math.inf, float(pm[0]))
    mean_max = max(-math.inf, float(pm[-1]))
    cum = np.cumsum(pw)
    return dict(
        processed_means=pm,
        processed_weights=pw,
        cumulative_weights=cum,
        processed_weight=processed_weight,
        mean_min=mean_min,
        mean_max=mean_max,
    )


# ---------------------------------------------------------------------------
# Pallas kernel: elementwise CDF evaluation (the hot path of forward()).
# ---------------------------------------------------------------------------
def _cdf_kernel(means_ref, cum_ref, x_ref, o_ref, *,
                n_proc, block_rows, sub_rows,
                mean_min, mean_max, m0, mn, inv_total_w,
                tail_r_is_one, scan_unroll):
    big = 1e30

    def sub_tile(r, carry):
        row0 = pl.multiple_of(r * sub_rows, sub_rows)
        x = x_ref[pl.ds(row0, sub_rows), :].astype(jnp.float32)

        # --- fused searchsorted(processed_means, x, side='left') ------------
        # hit_k := means[k] < x.  means is sorted, so hits form a prefix and
        # hit_{k-1} XOR hit_k fires exactly once, at k == upper where
        # means[upper-1] < x <= means[upper].  One ascending scan yields both
        # bracketing centroids: 2 SMEM loads + ~6 VPU ops per centroid.
        m_prev = means_ref[0]
        c_prev = cum_ref[0]
        hit_prev = m_prev < x
        lo_m = jnp.full_like(x, -big)
        lo_c = jnp.zeros_like(x)
        hi_m = jnp.full_like(x, big)
        hi_c = jnp.zeros_like(x)

        def scan(k, c):
            hit_prev, lo_m, lo_c, hi_m, hi_c, m_prev, c_prev = c
            mk = means_ref[k]
            ck = cum_ref[k]
            hit = mk < x
            bracket = jnp.logical_xor(hit_prev, hit)
            lo_m = jnp.where(bracket, m_prev, lo_m)
            lo_c = jnp.where(bracket, c_prev, lo_c)
            hi_m = jnp.where(bracket, mk, hi_m)
            hi_c = jnp.where(bracket, ck, hi_c)
            return hit, lo_m, lo_c, hi_m, hi_c, mk, ck

        _, lo_m, lo_c, hi_m, hi_c, _, _ = lax.fori_loop(
            1, n_proc, scan,
            (hit_prev, lo_m, lo_c, hi_m, hi_c, m_prev, c_prev),
            unroll=scan_unroll)

        # interior: _weighted_average(cum[upper-1], z1, cum[upper], z2) / W.
        # cum is strictly increasing and lo index < hi index, so lo_c < hi_c
        # always -> the torch swap logic is dead and omitted.
        z1 = x - lo_m
        z2 = hi_m - x
        wa = (lo_c * z1 + hi_c * z2) / (z1 + z2)
        wa = jnp.maximum(lo_c, jnp.minimum(wa, hi_c))
        interior_val = wa * inv_total_w

        in_range = jnp.logical_and(x > mean_min, x < mean_max)
        interior = jnp.logical_and(in_range,
                                   jnp.logical_and(x > m0, x < mn))

        out = jnp.where(x >= mean_max, 1.0, 0.0)      # at_min stays 0.0
        # Left tail: if means[0] > mean_min torch writes 0.0 (our default);
        # if means[0] == mean_min the tail_l selection is provably empty.
        if tail_r_is_one:
            out = jnp.where(jnp.logical_and(in_range, x >= mn), 1.0, out)
        # else: mean_max == means[-1] -> tail_r selection is provably empty.
        out = jnp.where(interior, interior_val, out)

        o_ref[pl.ds(row0, sub_rows), :] = out.astype(o_ref.dtype)
        return carry

    lax.fori_loop(0, block_rows // sub_rows, sub_tile, 0)


# ---------------------------------------------------------------------------
# Wrapper == TDigestDistribution.forward(x)
# ---------------------------------------------------------------------------
def tdigest_distribution_forward(x, digest):
    means64 = np.asarray(digest["processed_means"], dtype=np.float64)
    n_proc = int(means64.shape[0])
    assert n_proc > 1  # TODO(synk): n_processed in {0,1} degenerate paths handled statically only.

    f32 = lambda v: float(np.float32(v))
    means = jnp.asarray(means64, dtype=jnp.float32)
    cum = jnp.asarray(digest["cumulative_weights"], dtype=jnp.float32)

    orig_shape = x.shape
    orig_dtype = x.dtype
    n = int(np.prod(orig_shape)) if len(orig_shape) else 1
    if n == 0:
        return jnp.zeros(orig_shape, orig_dtype)

    flat = jnp.ravel(x)                     # native dtype; upcast in-kernel
    pad = (-n) % LANE
    if pad:
        # Only when numel is not a multiple of 128 (< 128 extra elements).
        flat = jnp.pad(flat, (0, pad))
    rows = (n + pad) // LANE

    # Big blocks amortize the ~0.35us/step grid overhead, but keep >= 2 grid
    # steps when possible so the "parallel" axis still splits across both
    # TensorCores on v7x.
    if rows <= SUB_ROWS:
        tm, sub = rows, rows                # tiny input: one full-extent block
    else:
        tm = min(MAX_BLOCK_ROWS,
                 max(SUB_ROWS, (pl.cdiv(rows, 2) // SUB_ROWS) * SUB_ROWS))
        sub = SUB_ROWS
    grid = pl.cdiv(rows, tm)                # partial last block handled by Pallas

    kernel = functools.partial(
        _cdf_kernel,
        n_proc=n_proc,
        block_rows=tm,
        sub_rows=sub,
        mean_min=f32(digest["mean_min"]),
        mean_max=f32(digest["mean_max"]),
        m0=f32(means64[0]),
        mn=f32(means64[-1]),
        inv_total_w=float(1.0 / np.float32(digest["processed_weight"])),
        tail_r_is_one=bool(digest["mean_max"] - means64[-1] > 0.0),
        scan_unroll=(True if n_proc <= 64 else 8),
    )

    xm = flat.reshape(rows, LANE)
    out = pl.pallas_call(
        kernel,
        out_shape=jax.ShapeDtypeStruct((rows, LANE), orig_dtype),
        grid_spec=pltpu.PrefetchScalarGridSpec(
            num_scalar_prefetch=2,          # means, cum -> SMEM
            grid=(grid,),
            in_specs=[pl.BlockSpec((tm, LANE), lambda i, means, cum: (i, 0))],
            out_specs=pl.BlockSpec((tm, LANE), lambda i, means, cum: (i, 0)),
        ),
        compiler_params=pltpu.CompilerParams(
            dimension_semantics=("parallel",)),
    )(means, cum, xm)

    if pad:
        out = out.reshape(-1)[:n]
    return out.reshape(orig_shape)


# ---------------------------------------------------------------------------
# Pure-numpy reference (same f32 precision as the kernel) for verification.
# ---------------------------------------------------------------------------
def cdf_reference(x, digest):
    means = digest["processed_means"].astype(np.float32)
    cum = digest["cumulative_weights"].astype(np.float32)
    W = np.float32(digest["processed_weight"])
    mean_min = np.float32(digest["mean_min"])
    mean_max = np.float32(digest["mean_max"])
    w0 = np.float32(digest["processed_weights"][0])
    wl = np.float32(digest["processed_weights"][-1])

    xf = np.asarray(x, dtype=np.float32).reshape(-1)
    out = np.zeros_like(xf)
    at_min = xf <= mean_min
    at_max = xf >= mean_max
    out[at_max] = 1.0
    mask = ~(at_min | at_max)
    m0 = means[0]
    mn = means[-1]
    tail_l = mask & (xf <= m0)
    if m0 - mean_min > 0.0:
        out[tail_l] = 0.0
    else:
        with np.errstate(divide="ignore", invalid="ignore"):
            out[tail_l] = (xf[tail_l] - mean_min) / (m0 - mean_min) * w0 / W / 2.0
    tail_r = mask & (xf >= mn)
    if mean_max - mn > 0.0:
        out[tail_r] = 1.0
    else:
        with np.errstate(divide="ignore", invalid="ignore"):
            out[tail_r] = 1.0 - (mean_max - xf[tail_r]) / (mean_max - mn) * wl / W / 2.0
    mask &= ~(tail_l | tail_r)
    upper = np.searchsorted(means, xf[mask], side="left")
    z1 = xf[mask] - means[upper - 1]
    z2 = means[upper] - xf[mask]
    x1 = cum[upper - 1]
    x2 = cum[upper]
    wa = (x1 * z1 + x2 * z2) / (z1 + z2)
    wa = np.maximum(x1, np.minimum(wa, x2))
    out[mask] = wa / W
    return out.reshape(np.asarray(x).shape)


if __name__ == "__main__":
    key = jax.random.PRNGKey(0)
    k_train, k_x = jax.random.split(key)

    # Deterministic "stats" phase: finalized digest built from a training sample.
    compression = 50.0
    train = np.asarray(
        jax.random.normal(k_train, (384,), dtype=jnp.float32), dtype=np.float64)
    digest = build_finalized_digest(train, compression)

    # Forward pass input.
    x = jax.random.normal(k_x, (2, 4, 16, 16), dtype=jnp.float32) * 1.5

    y = tdigest_distribution_forward(x, digest)
    y = jax.block_until_ready(y)

    y_ref = cdf_reference(np.asarray(x), digest)
    np.testing.assert_allclose(np.asarray(y), y_ref, rtol=1e-5, atol=1e-5)
    assert y.shape == x.shape and y.dtype == x.dtype
    print("KERNEL_OK")
</pallas_src>

<mosaic_0001>
module attributes {stable_mosaic.version = 11 : i64} {
  func.func @_cdf_kernel(%arg0: i32, %arg1: memref<53xf32, #tpu.memory_space<smem>>, %arg2: memref<53xf32, #tpu.memory_space<smem>>, %arg3: memref<8x128xf32, #tpu.memory_space<vmem>>, %arg4: memref<8x128xf32, #tpu.memory_space<vmem>>) attributes {dimension_semantics = [#tpu.dimension_semantics<parallel>], iteration_bounds = array<i64: 2>, scalar_prefetch = 2 : i64, scratch_operands = 0 : i64, tpu.core_type = #tpu.core_type<tc>, window_params = [{transform_indices = @transform_0, window_bounds = array<i64: 8, 128>}, {transform_indices = @transform_1, window_bounds = array<i64: 8, 128>}]} {
    %c0_i32 = arith.constant 0 : i32
    %c8_i32 = arith.constant 8 : i32
    %0 = arith.muli %c0_i32, %c8_i32 : i32
    %1 = tpu.assume_multiple %0, 8 : i32
    %2 = arith.index_cast %1 : i32 to index
    %c0 = arith.constant 0 : index
    %3 = vector.load %arg3[%2, %c0] : memref<8x128xf32, #tpu.memory_space<vmem>>, vector<8x128xf32>
    %c0_0 = arith.constant 0 : index
    %4 = memref.load %arg1[%c0_0] : memref<53xf32, #tpu.memory_space<smem>>
    %c0_1 = arith.constant 0 : index
    %5 = memref.load %arg2[%c0_1] : memref<53xf32, #tpu.memory_space<smem>>
    %6 = vector.broadcast %4 : f32 to vector<8x128xf32>
    %7 = arith.cmpf olt, %6, %3 : vector<8x128xf32>
    %cst = arith.constant -1.000000e+30 : f32
    %8 = vector.broadcast %cst : f32 to vector<8x128xf32>
    %cst_2 = arith.constant 0.000000e+00 : f32
    %9 = vector.broadcast %cst_2 : f32 to vector<8x128xf32>
    %cst_3 = arith.constant 1.000000e+30 : f32
    %10 = vector.broadcast %cst_3 : f32 to vector<8x128xf32>
    %cst_4 = arith.constant 0.000000e+00 : f32
    %11 = vector.broadcast %cst_4 : f32 to vector<8x128xf32>
    %c1_i32 = arith.constant 1 : i32
    %12 = arith.index_cast %c1_i32 : i32 to index
    %13 = memref.load %arg1[%12] : memref<53xf32, #tpu.memory_space<smem>>
    %14 = arith.index_cast %c1_i32 : i32 to index
    %15 = memref.load %arg2[%14] : memref<53xf32, #tpu.memory_space<smem>>
    %16 = vector.broadcast %13 : f32 to vector<8x128xf32>
    %17 = arith.cmpf olt, %16, %3 : vector<8x128xf32>
    %18 = arith.xori %7, %17 : vector<8x128xi1>
    %19 = vector.broadcast %4 : f32 to vector<8x128xf32>
    %20 = arith.select %18, %19, %8 : vector<8x128xi1>, vector<8x128xf32>
    %21 = vector.broadcast %5 : f32 to vector<8x128xf32>
    %22 = arith.select %18, %21, %9 : vector<8x128xi1>, vector<8x128xf32>
    %23 = vector.broadcast %13 : f32 to vector<8x128xf32>
    %24 = arith.select %18, %23, %10 : vector<8x128xi1>, vector<8x128xf32>
    %25 = vector.broadcast %15 : f32 to vector<8x128xf32>
    %26 = arith.select %18, %25, %11 : vector<8x128xi1>, vector<8x128xf32>
    %c2_i32 = arith.constant 2 : i32
    %27 = arith.index_cast %c2_i32 : i32 to index
    %28 = memref.load %arg1[%27] : memref<53xf32, #tpu.memory_space<smem>>
    %29 = arith.index_cast %c2_i32 : i32 to index
    %30 = memref.load %arg2[%29] : memref<53xf32, #tpu.memory_space<smem>>
    %31 = vector.broadcast %28 : f32 to vector<8x128xf32>
    %32 = arith.cmpf olt, %31, %3 : vector<8x128xf32>
    %33 = arith.xori %17, %32 : vector<8x128xi1>
    %34 = vector.broadcast %13 : f32 to vector<8x128xf32>
    %35 = arith.select %33, %34, %20 : vector<8x128xi1>, vector<8x128xf32>
    %36 = vector.broadcast %15 : f32 to vector<8x128xf32>
    %37 = arith.select %33, %36, %22 : vector<8x128xi1>, vector<8x128xf32>
    %38 = vector.broadcast %28 : f32 to vector<8x128xf32>
    %39 = arith.select %33, %38, %24 : vector<8x128xi1>, vector<8x128xf32>
    %40 = vector.broadcast %30 : f32 to vector<8x128xf32>
    %41 = arith.select %33, %40, %26 : vector<8x128xi1>, vector<8x128xf32>
    %c3_i32 = arith.constant 3 : i32
    %42 = arith.index_cast %c3_i32 : i32 to index
    %43 = memref.load %arg1[%42] : memref<53xf32, #tpu.memory_space<smem>>
    %44 = arith.index_cast %c3_i32 : i32 to index
    %45 = memref.load %arg2[%44] : memref<53xf32, #tpu.memory_space<smem>>
    %46 = vector.broadcast %43 : f32 to vector<8x128xf32>
    %47 = arith.cmpf olt, %46, %3 : vector<8x128xf32>
    %48 = arith.xori %32, %47 : vector<8x128xi1>
    %49 = vector.broadcast %28 : f32 to vector<8x128xf32>
    %50 = arith.select %48, %49, %35 : vector<8x128xi1>, vector<8x128xf32>
    %51 = vector.broadcast %30 : f32 to vector<8x128xf32>
    %52 = arith.select %48, %51, %37 : vector<8x128xi1>, vector<8x128xf32>
    %53 = vector.broadcast %43 : f32 to vector<8x128xf32>
    %54 = arith.select %48, %53, %39 : vector<8x128xi1>, vector<8x128xf32>
    %55 = vector.broadcast %45 : f32 to vector<8x128xf32>
    %56 = arith.select %48, %55, %41 : vector<8x128xi1>, vector<8x128xf32>
    %c4_i32 = arith.constant 4 : i32
    %57 = arith.index_cast %c4_i32 : i32 to index
    %58 = memref.load %arg1[%57] : memref<53xf32, #tpu.memory_space<smem>>
    %59 = arith.index_cast %c4_i32 : i32 to index
    %60 = memref.load %arg2[%59] : memref<53xf32, #tpu.memory_space<smem>>
    %61 = vector.broadcast %58 : f32 to vector<8x128xf32>
    %62 = arith.cmpf olt, %61, %3 : vector<8x128xf32>
    %63 = arith.xori %47, %62 : vector<8x128xi1>
    %64 = vector.broadcast %43 : f32 to vector<8x128xf32>
    %65 = arith.select %63, %64, %50 : vector<8x128xi1>, vector<8x128xf32>
    %66 = vector.broadcast %45 : f32 to vector<8x128xf32>
    %67 = arith.select %63, %66, %52 : vector<8x128xi1>, vector<8x128xf32>
    %68 = vector.broadcast %58 : f32 to vector<8x128xf32>
    %69 = arith.select %63, %68, %54 : vector<8x128xi1>, vector<8x128xf32>
    %70 = vector.broadcast %60 : f32 to vector<8x128xf32>
    %71 = arith.select %63, %70, %56 : vector<8x128xi1>, vector<8x128xf32>
    %c5_i32 = arith.constant 5 : i32
    %72 = arith.index_cast %c5_i32 : i32 to index
    %73 = memref.load %arg1[%72] : memref<53xf32, #tpu.memory_space<smem>>
    %74 = arith.index_cast %c5_i32 : i32 to index
    %75 = memref.load %arg2[%74] : memref<53xf32, #tpu.memory_space<smem>>
    %76 = vector.broadcast %73 : f32 to vector<8x128xf32>
    %77 = arith.cmpf olt, %76, %3 : vector<8x128xf32>
    %78 = arith.xori %62, %77 : vector<8x128xi1>
    %79 = vector.broadcast %58 : f32 to vector<8x128xf32>
    %80 = arith.select %78, %79, %65 : vector<8x128xi1>, vector<8x128xf32>
    %81 = vector.broadcast %60 : f32 to vector<8x128xf32>
    %82 = arith.select %78, %81, %67 : vector<8x128xi1>, vector<8x128xf32>
    %83 = vector.broadcast %73 : f32 to vector<8x128xf32>
    %84 = arith.select %78, %83, %69 : vector<8x128xi1>, vector<8x128xf32>
    %85 = vector.broadcast %75 : f32 to vector<8x128xf32>
    %86 = arith.select %78, %85, %71 : vector<8x128xi1>, vector<8x128xf32>
    %c6_i32 = arith.constant 6 : i32
    %87 = arith.index_cast %c6_i32 : i32 to index
    %88 = memref.load %arg1[%87] : memref<53xf32, #tpu.memory_space<smem>>
    %89 = arith.index_cast %c6_i32 : i32 to index
    %90 = memref.load %arg2[%89] : memref<53xf32, #tpu.memory_space<smem>>
    %91 = vector.broadcast %88 : f32 to vector<8x128xf32>
    %92 = arith.cmpf olt, %91, %3 : vector<8x128xf32>
    %93 = arith.xori %77, %92 : vector<8x128xi1>
    %94 = vector.broadcast %73 : f32 to vector<8x128xf32>
    %95 = arith.select %93, %94, %80 : vector<8x128xi1>, vector<8x128xf32>
    %96 = vector.broadcast %75 : f32 to vector<8x128xf32>
    %97 = arith.select %93, %96, %82 : vector<8x128xi1>, vector<8x128xf32>
    %98 = vector.broadcast %88 : f32 to vector<8x128xf32>
    %99 = arith.select %93, %98, %84 : vector<8x128xi1>, vector<8x128xf32>
    %100 = vector.broadcast %90 : f32 to vector<8x128xf32>
    %101 = arith.select %93, %100, %86 : vector<8x128xi1>, vector<8x128xf32>
    %c7_i32 = arith.constant 7 : i32
    %102 = arith.index_cast %c7_i32 : i32 to index
    %103 = memref.load %arg1[%102] : memref<53xf32, #tpu.memory_space<smem>>
    %104 = arith.index_cast %c7_i32 : i32 to index
    %105 = memref.load %arg2[%104] : memref<53xf32, #tpu.memory_space<smem>>
    %106 = vector.broadcast %103 : f32 to vector<8x128xf32>
    %107 = arith.cmpf olt, %106, %3 : vector<8x128xf32>
    %108 = arith.xori %92, %107 : vector<8x128xi1>
    %109 = vector.broadcast %88 : f32 to vector<8x128xf32>
    %110 = arith.select %108, %109, %95 : vector<8x128xi1>, vector<8x128xf32>
    %111 = vector.broadcast %90 : f32 to vector<8x128xf32>
    %112 = arith.select %108, %111, %97 : vector<8x128xi1>, vector<8x128xf32>
    %113 = vector.broadcast %103 : f32 to vector<8x128xf32>
    %114 = arith.select %108, %113, %99 : vector<8x128xi1>, vector<8x128xf32>
    %115 = vector.broadcast %105 : f32 to vector<8x128xf32>
    %116 = arith.select %108, %115, %101 : vector<8x128xi1>, vector<8x128xf32>
    %c8_i32_5 = arith.constant 8 : i32
    %117 = arith.index_cast %c8_i32_5 : i32 to index
    %118 = memref.load %arg1[%117] : memref<53xf32, #tpu.memory_space<smem>>
    %119 = arith.index_cast %c8_i32_5 : i32 to index
    %120 = memref.load %arg2[%119] : memref<53xf32, #tpu.memory_space<smem>>
    %121 = vector.broadcast %118 : f32 to vector<8x128xf32>
    %122 = arith.cmpf olt, %121, %3 : vector<8x128xf32>
    %123 = arith.xori %107, %122 : vector<8x128xi1>
    %124 = vector.broadcast %103 : f32 to vector<8x128xf32>
    %125 = arith.select %123, %124, %110 : vector<8x128xi1>, vector<8x128xf32>
    %126 = vector.broadcast %105 : f32 to vector<8x128xf32>
    %127 = arith.select %123, %126, %112 : vector<8x128xi1>, vector<8x128xf32>
    %128 = vector.broadcast %118 : f32 to vector<8x128xf32>
    %129 = arith.select %123, %128, %114 : vector<8x128xi1>, vector<8x128xf32>
    %130 = vector.broadcast %120 : f32 to vector<8x128xf32>
    %131 = arith.select %123, %130, %116 : vector<8x128xi1>, vector<8x128xf32>
    %c9_i32 = arith.constant 9 : i32
    %132 = arith.index_cast %c9_i32 : i32 to index
    %133 = memref.load %arg1[%132] : memref<53xf32, #tpu.memory_space<smem>>
    %134 = arith.index_cast %c9_i32 : i32 to index
    %135 = memref.load %arg2[%134] : memref<53xf32, #tpu.memory_space<smem>>
    %136 = vector.broadcast %133 : f32 to vector<8x128xf32>
    %137 = arith.cmpf olt, %136, %3 : vector<8x128xf32>
    %138 = arith.xori %122, %137 : vector<8x128xi1>
    %139 = vector.broadcast %118 : f32 to vector<8x128xf32>
    %140 = arith.select %138, %139, %125 : vector<8x128xi1>, vector<8x128xf32>
    %141 = vector.broadcast %120 : f32 to vector<8x128xf32>
    %142 = arith.select %138, %141, %127 : vector<8x128xi1>, vector<8x128xf32>
    %143 = vector.broadcast %133 : f32 to vector<8x128xf32>
    %144 = arith.select %138, %143, %129 : vector<8x128xi1>, vector<8x128xf32>
    %145 = vector.broadcast %135 : f32 to vector<8x128xf32>
    %146 = arith.select %138, %145, %131 : vector<8x128xi1>, vector<8x128xf32>
    %c10_i32 = arith.constant 10 : i32
    %147 = arith.index_cast %c10_i32 : i32 to index
    %148 = memref.load %arg1[%147] : memref<53xf32, #tpu.memory_space<smem>>
    %149 = arith.index_cast %c10_i32 : i32 to index
    %150 = memref.load %arg2[%149] : memref<53xf32, #tpu.memory_space<smem>>
    %151 = vector.broadcast %148 : f32 to vector<8x128xf32>
    %152 = arith.cmpf olt, %151, %3 : vector<8x128xf32>
    %153 = arith.xori %137, %152 : vector<8x128xi1>
    %154 = vector.broadcast %133 : f32 to vector<8x128xf32>
    %155 = arith.select %153, %154, %140 : vector<8x128xi1>, vector<8x128xf32>
    %156 = vector.broadcast %135 : f32 to vector<8x128xf32>
    %157 = arith.select %153, %156, %142 : vector<8x128xi1>, vector<8x128xf32>
    %158 = vector.broadcast %148 : f32 to vector<8x128xf32>
    %159 = arith.select %153, %158, %144 : vector<8x128xi1>, vector<8x128xf32>
    %160 = vector.broadcast %150 : f32 to vector<8x128xf32>
    %161 = arith.select %153, %160, %146 : vector<8x128xi1>, vector<8x128xf32>
    %c11_i32 = arith.constant 11 : i32
    %162 = arith.index_cast %c11_i32 : i32 to index
    %163 = memref.load %arg1[%162] : memref<53xf32, #tpu.memory_space<smem>>
    %164 = arith.index_cast %c11_i32 : i32 to index
    %165 = memref.load %arg2[%164] : memref<53xf32, #tpu.memory_space<smem>>
    %166 = vector.broadcast %163 : f32 to vector<8x128xf32>
    %167 = arith.cmpf olt, %166, %3 : vector<8x128xf32>
    %168 = arith.xori %152, %167 : vector<8x128xi1>
    %169 = vector.broadcast %148 : f32 to vector<8x128xf32>
    %170 = arith.select %168, %169, %155 : vector<8x128xi1>, vector<8x128xf32>
    %171 = vector.broadcast %150 : f32 to vector<8x128xf32>
    %172 = arith.select %168, %171, %157 : vector<8x128xi1>, vector<8x128xf32>
    %173 = vector.broadcast %163 : f32 to vector<8x128xf32>
    %174 = arith.select %168, %173, %159 : vector<8x128xi1>, vector<8x128xf32>
    %175 = vector.broadcast %165 : f32 to vector<8x128xf32>
    %176 = arith.select %168, %175, %161 : vector<8x128xi1>, vector<8x128xf32>
    %c12_i32 = arith.constant 12 : i32
    %177 = arith.index_cast %c12_i32 : i32 to index
    %178 = memref.load %arg1[%177] : memref<53xf32, #tpu.memory_space<smem>>
    %179 = arith.index_cast %c12_i32 : i32 to index
    %180 = memref.load %arg2[%179] : memref<53xf32, #tpu.memory_space<smem>>
    %181 = vector.broadcast %178 : f32 to vector<8x128xf32>
    %182 = arith.cmpf olt, %181, %3 : vector<8x128xf32>
    %183 = arith.xori %167, %182 : vector<8x128xi1>
    %184 = vector.broadcast %163 : f32 to vector<8x128xf32>
    %185 = arith.select %183, %184, %170 : vector<8x128xi1>, vector<8x128xf32>
    %186 = vector.broadcast %165 : f32 to vector<8x128xf32>
    %187 = arith.select %183, %186, %172 : vector<8x128xi1>, vector<8x128xf32>
    %188 = vector.broadcast %178 : f32 to vector<8x128xf32>
    %189 = arith.select %183, %188, %174 : vector<8x128xi1>, vector<8x128xf32>
    %190 = vector.broadcast %180 : f32 to vector<8x128xf32>
    %191 = arith.select %183, %190, %176 : vector<8x128xi1>, vector<8x128xf32>
    %c13_i32 = arith.constant 13 : i32
    %192 = arith.index_cast %c13_i32 : i32 to index
    %193 = memref.load %arg1[%192] : memref<53xf32, #tpu.memory_space<smem>>
    %194 = arith.index_cast %c13_i32 : i32 to index
    %195 = memref.load %arg2[%194] : memref<53xf32, #tpu.memory_space<smem>>
    %196 = vector.broadcast %193 : f32 to vector<8x128xf32>
    %197 = arith.cmpf olt, %196, %3 : vector<8x128xf32>
    %198 = arith.xori %182, %197 : vector<8x128xi1>
    %199 = vector.broadcast %178 : f32 to vector<8x128xf32>
    %200 = arith.select %198, %199, %185 : vector<8x128xi1>, vector<8x128xf32>
    %201 = vector.broadcast %180 : f32 to vector<8x128xf32>
    %202 = arith.select %198, %201, %187 : vector<8x128xi1>, vector<8x128xf32>
    %203 = vector.broadcast %193 : f32 to vector<8x128xf32>
    %204 = arith.select %198, %203, %189 : vector<8x128xi1>, vector<8x128xf32>
    %205 = vector.broadcast %195 : f32 to vector<8x128xf32>
    %206 = arith.select %198, %205, %191 : vector<8x128xi1>, vector<8x128xf32>
    %c14_i32 = arith.constant 14 : i32
    %207 = arith.index_cast %c14_i32 : i32 to index
    %208 = memref.load %arg1[%207] : memref<53xf32, #tpu.memory_space<smem>>
    %209 = arith.index_cast %c14_i32 : i32 to index
    %210 = memref.load %arg2[%209] : memref<53xf32, #tpu.memory_space<smem>>
    %211 = vector.broadcast %208 : f32 to vector<8x128xf32>
    %212 = arith.cmpf olt, %211, %3 : vector<8x128xf32>
    %213 = arith.xori %197, %212 : vector<8x128xi1>
    %214 = vector.broadcast %193 : f32 to vector<8x128xf32>
    %215 = arith.select %213, %214, %200 : vector<8x128xi1>, vector<8x128xf32>
    %216 = vector.broadcast %195 : f32 to vector<8x128xf32>
    %217 = arith.select %213, %216, %202 : vector<8x128xi1>, vector<8x128xf32>
    %218 = vector.broadcast %208 : f32 to vector<8x128xf32>
    %219 = arith.select %213, %218, %204 : vector<8x128xi1>, vector<8x128xf32>
    %220 = vector.broadcast %210 : f32 to vector<8x128xf32>
    %221 = arith.select %213, %220, %206 : vector<8x128xi1>, vector<8x128xf32>
    %c15_i32 = arith.constant 15 : i32
    %222 = arith.index_cast %c15_i32 : i32 to index
    %223 = memref.load %arg1[%222] : memref<53xf32, #tpu.memory_space<smem>>
    %224 = arith.index_cast %c15_i32 : i32 to index
    %225 = memref.load %arg2[%224] : memref<53xf32, #tpu.memory_space<smem>>
    %226 = vector.broadcast %223 : f32 to vector<8x128xf32>
    %227 = arith.cmpf olt, %226, %3 : vector<8x128xf32>
    %228 = arith.xori %212, %227 : vector<8x128xi1>
    %229 = vector.broadcast %208 : f32 to vector<8x128xf32>
    %230 = arith.select %228, %229, %215 : vector<8x128xi1>, vector<8x128xf32>
    %231 = vector.broadcast %210 : f32 to vector<8x128xf32>
    %232 = arith.select %228, %231, %217 : vector<8x128xi1>, vector<8x128xf32>
    %233 = vector.broadcast %223 : f32 to vector<8x128xf32>
    %234 = arith.select %228, %233, %219 : vector<8x128xi1>, vector<8x128xf32>
    %235 = vector.broadcast %225 : f32 to vector<8x128xf32>
    %236 = arith.select %228, %235, %221 : vector<8x128xi1>, vector<8x128xf32>
    %c16_i32 = arith.constant 16 : i32
    %237 = arith.index_cast %c16_i32 : i32 to index
    %238 = memref.load %arg1[%237] : memref<53xf32, #tpu.memory_space<smem>>
    %239 = arith.index_cast %c16_i32 : i32 to index
    %240 = memref.load %arg2[%239] : memref<53xf32, #tpu.memory_space<smem>>
    %241 = vector.broadcast %238 : f32 to vector<8x128xf32>
    %242 = arith.cmpf olt, %241, %3 : vector<8x128xf32>
    %243 = arith.xori %227, %242 : vector<8x128xi1>
    %244 = vector.broadcast %223 : f32 to vector<8x128xf32>
    %245 = arith.select %243, %244, %230 : vector<8x128xi1>, vector<8x128xf32>
    %246 = vector.broadcast %225 : f32 to vector<8x128xf32>
    %247 = arith.select %243, %246, %232 : vector<8x128xi1>, vector<8x128xf32>
    %248 = vector.broadcast %238 : f32 to vector<8x128xf32>
    %249 = arith.select %243, %248, %234 : vector<8x128xi1>, vector<8x128xf32>
    %250 = vector.broadcast %240 : f32 to vector<8x128xf32>
    %251 = arith.select %243, %250, %236 : vector<8x128xi1>, vector<8x128xf32>
    %c17_i32 = arith.constant 17 : i32
    %252 = arith.index_cast %c17_i32 : i32 to index
    %253 = memref.load %arg1[%252] : memref<53xf32, #tpu.memory_space<smem>>
    %254 = arith.index_cast %c17_i32 : i32 to index
    %255 = memref.load %arg2[%254] : memref<53xf32, #tpu.memory_space<smem>>
    %256 = vector.broadcast %253 : f32 to vector<8x128xf32>
    %257 = arith.cmpf olt, %256, %3 : vector<8x128xf32>
    %258 = arith.xori %242, %257 : vector<8x128xi1>
    %259 = vector.broadcast %238 : f32 to vector<8x128xf32>
    %260 = arith.select %258, %259, %245 : vector<8x128xi1>, vector<8x128xf32>
    %261 = vector.broadcast %240 : f32 to vector<8x128xf32>
    %262 = arith.select %258, %261, %247 : vector<8x128xi1>, vector<8x128xf32>
    %263 = vector.broadcast %253 : f32 to vector<8x128xf32>
    %264 = arith.select %258, %263, %249 : vector<8x128xi1>, vector<8x128xf32>
    %265 = vector.broadcast %255 : f32 to vector<8x128xf32>
    %266 = arith.select %258, %265, %251 : vector<8x128xi1>, vector<8x128xf32>
    %c18_i32 = arith.constant 18 : i32
    %267 = arith.index_cast %c18_i32 : i32 to index
    %268 = memref.load %arg1[%267] : memref<53xf32, #tpu.memory_space<smem>>
    %269 = arith.index_cast %c18_i32 : i32 to index
    %270 = memref.load %arg2[%269] : memref<53xf32, #tpu.memory_space<smem>>
    %271 = vector.broadcast %268 : f32 to vector<8x128xf32>
    %272 = arith.cmpf olt, %271, %3 : vector<8x128xf32>
    %273 = arith.xori %257, %272 : vector<8x128xi1>
    %274 = vector.broadcast %253 : f32 to vector<8x128xf32>
    %275 = arith.select %273, %274, %260 : vector<8x128xi1>, vector<8x128xf32>
    %276 = vector.broadcast %255 : f32 to vector<8x128xf32>
    %277 = arith.select %273, %276, %262 : vector<8x128xi1>, vector<8x128xf32>
    %278 = vector.broadcast %268 : f32 to vector<8x128xf32>
    %279 = arith.select %273, %278, %264 : vector<8x128xi1>, vector<8x128xf32>
    %280 = vector.broadcast %270 : f32 to vector<8x128xf32>
    %281 = arith.select %273, %280, %266 : vector<8x128xi1>, vector<8x128xf32>
    %c19_i32 = arith.constant 19 : i32
    %282 = arith.index_cast %c19_i32 : i32 to index
    %283 = memref.load %arg1[%282] : memref<53xf32, #tpu.memory_space<smem>>
    %284 = arith.index_cast %c19_i32 : i32 to index
    %285 = memref.load %arg2[%284] : memref<53xf32, #tpu.memory_space<smem>>
    %286 = vector.broadcast %283 : f32 to vector<8x128xf32>
    %287 = arith.cmpf olt, %286, %3 : vector<8x128xf32>
    %288 = arith.xori %272, %287 : vector<8x128xi1>
    %289 = vector.broadcast %268 : f32 to vector<8x128xf32>
    %290 = arith.select %288, %289, %275 : vector<8x128xi1>, vector<8x128xf32>
    %291 = vector.broadcast %270 : f32 to vector<8x128xf32>
    %292 = arith.select %288, %291, %277 : vector<8x128xi1>, vector<8x128xf32>
    %293 = vector.broadcast %283 : f32 to vector<8x128xf32>
    %294 = arith.select %288, %293, %279 : vector<8x128xi1>, vector<8x128xf32>
    %295 = vector.broadcast %285 : f32 to vector<8x128xf32>
    %296 = arith.select %288, %295, %281 : vector<8x128xi1>, vector<8x128xf32>
    %c20_i32 = arith.constant 20 : i32
    %297 = arith.index_cast %c20_i32 : i32 to index
    %298 = memref.load %arg1[%297] : memref<53xf32, #tpu.memory_space<smem>>
    %299 = arith.index_cast %c20_i32 : i32 to index
    %300 = memref.load %arg2[%299] : memref<53xf32, #tpu.memory_space<smem>>
    %301 = vector.broadcast %298 : f32 to vector<8x128xf32>
    %302 = arith.cmpf olt, %301, %3 : vector<8x128xf32>
    %303 = arith.xori %287, %302 : vector<8x128xi1>
    %304 = vector.broadcast %283 : f32 to vector<8x128xf32>
    %305 = arith.select %303, %304, %290 : vector<8x128xi1>, vector<8x128xf32>
    %306 = vector.broadcast %285 : f32 to vector<8x128xf32>
    %307 = arith.select %303, %306, %292 : vector<8x128xi1>, vector<8x128xf32>
    %308 = vector.broadcast %298 : f32 to vector<8x128xf32>
    %309 = arith.select %303, %308, %294 : vector<8x128xi1>, vector<8x128xf32>
    %310 = vector.broadcast %300 : f32 to vector<8x128xf32>
    %311 = arith.select %303, %310, %296 : vector<8x128xi1>, vector<8x128xf32>
    %c21_i32 = arith.constant 21 : i32
    %312 = arith.index_cast %c21_i32 : i32 to index
    %313 = memref.load %arg1[%312] : memref<53xf32, #tpu.memory_space<smem>>
    %314 = arith.index_cast %c21_i32 : i32 to index
    %315 = memref.load %arg2[%314] : memref<53xf32, #tpu.memory_space<smem>>
    %316 = vector.broadcast %313 : f32 to vector<8x128xf32>
    %317 = arith.cmpf olt, %316, %3 : vector<8x128xf32>
    %318 = arith.xori %302, %317 : vector<8x128xi1>
    %319 = vector.broadcast %298 : f32 to vector<8x128xf32>
    %320 = arith.select %318, %319, %305 : vector<8x128xi1>, vector<8x128xf32>
    %321 = vector.broadcast %300 : f32 to vector<8x128xf32>
    %322 = arith.select %318, %321, %307 : vector<8x128xi1>, vector<8x128xf32>
    %323 = vector.broadcast %313 : f32 to vector<8x128xf32>
    %324 = arith.select %318, %323, %309 : vector<8x128xi1>, vector<8x128xf32>
    %325 = vector.broadcast %315 : f32 to vector<8x128xf32>
    %326 = arith.select %318, %325, %311 : vector<8x128xi1>, vector<8x128xf32>
    %c22_i32 = arith.constant 22 : i32
    %327 = arith.index_cast %c22_i32 : i32 to index
    %328 = memref.load %arg1[%327] : memref<53xf32, #tpu.memory_space<smem>>
    %329 = arith.index_cast %c22_i32 : i32 to index
    %330 = memref.load %arg2[%329] : memref<53xf32, #tpu.memory_space<smem>>
    %331 = vector.broadcast %328 : f32 to vector<8x128xf32>
    %332 = arith.cmpf olt, %331, %3 : vector<8x128xf32>
    %333 = arith.xori %317, %332 : vector<8x128xi1>
    %334 = vector.broadcast %313 : f32 to vector<8x128xf32>
    %335 = arith.select %333, %334, %320 : vector<8x128xi1>, vector<8x128xf32>
    %336 = vector.broadcast %315 : f32 to vector<8x128xf32>
    %337 = arith.select %333, %336, %322 : vector<8x128xi1>, vector<8x128xf32>
    %338 = vector.broadcast %328 : f32 to vector<8x128xf32>
    %339 = arith.select %333, %338, %324 : vector<8x128xi1>, vector<8x128xf32>
    %340 = vector.broadcast %330 : f32 to vector<8x128xf32>
    %341 = arith.select %333, %340, %326 : vector<8x128xi1>, vector<8x128xf32>
    %c23_i32 = arith.constant 23 : i32
    %342 = arith.index_cast %c23_i32 : i32 to index
    %343 = memref.load %arg1[%342] : memref<53xf32, #tpu.memory_space<smem>>
    %344 = arith.index_cast %c23_i32 : i32 to index
    %345 = memref.load %arg2[%344] : memref<53xf32, #tpu.memory_space<smem>>
    %346 = vector.broadcast %343 : f32 to vector<8x128xf32>
    %347 = arith.cmpf olt, %346, %3 : vector<8x128xf32>
    %348 = arith.xori %332, %347 : vector<8x128xi1>
    %349 = vector.broadcast %328 : f32 to vector<8x128xf32>
    %350 = arith.select %348, %349, %335 : vector<8x128xi1>, vector<8x128xf32>
    %351 = vector.broadcast %330 : f32 to vector<8x128xf32>
    %352 = arith.select %348, %351, %337 : vector<8x128xi1>, vector<8x128xf32>
    %353 = vector.broadcast %343 : f32 to vector<8x128xf32>
    %354 = arith.select %348, %353, %339 : vector<8x128xi1>, vector<8x128xf32>
    %355 = vector.broadcast %345 : f32 to vector<8x128xf32>
    %356 = arith.select %348, %355, %341 : vector<8x128xi1>, vector<8x128xf32>
    %c24_i32 = arith.constant 24 : i32
    %357 = arith.index_cast %c24_i32 : i32 to index
    %358 = memref.load %arg1[%357] : memref<53xf32, #tpu.memory_space<smem>>
    %359 = arith.index_cast %c24_i32 : i32 to index
    %360 = memref.load %arg2[%359] : memref<53xf32, #tpu.memory_space<smem>>
    %361 = vector.broadcast %358 : f32 to vector<8x128xf32>
    %362 = arith.cmpf olt, %361, %3 : vector<8x128xf32>
    %363 = arith.xori %347, %362 : vector<8x128xi1>
    %364 = vector.broadcast %343 : f32 to vector<8x128xf32>
    %365 = arith.select %363, %364, %350 : vector<8x128xi1>, vector<8x128xf32>
    %366 = vector.broadcast %345 : f32 to vector<8x128xf32>
    %367 = arith.select %363, %366, %352 : vector<8x128xi1>, vector<8x128xf32>
    %368 = vector.broadcast %358 : f32 to vector<8x128xf32>
    %369 = arith.select %363, %368, %354 : vector<8x128xi1>, vector<8x128xf32>
    %370 = vector.broadcast %360 : f32 to vector<8x128xf32>
    %371 = arith.select %363, %370, %356 : vector<8x128xi1>, vector<8x128xf32>
    %c25_i32 = arith.constant 25 : i32
    %372 = arith.index_cast %c25_i32 : i32 to index
    %373 = memref.load %arg1[%372] : memref<53xf32, #tpu.memory_space<smem>>
    %374 = arith.index_cast %c25_i32 : i32 to index
    %375 = memref.load %arg2[%374] : memref<53xf32, #tpu.memory_space<smem>>
    %376 = vector.broadcast %373 : f32 to vector<8x128xf32>
    %377 = arith.cmpf olt, %376, %3 : vector<8x128xf32>
    %378 = arith.xori %362, %377 : vector<8x128xi1>
    %379 = vector.broadcast %358 : f32 to vector<8x128xf32>
    %380 = arith.select %378, %379, %365 : vector<8x128xi1>, vector<8x128xf32>
    %381 = vector.broadcast %360 : f32 to vector<8x128xf32>
    %382 = arith.select %378, %381, %367 : vector<8x128xi1>, vector<8x128xf32>
    %383 = vector.broadcast %373 : f32 to vector<8x128xf32>
    %384 = arith.select %378, %383, %369 : vector<8x128xi1>, vector<8x128xf32>
    %385 = vector.broadcast %375 : f32 to vector<8x128xf32>
    %386 = arith.select %378, %385, %371 : vector<8x128xi1>, vector<8x128xf32>
    %c26_i32 = arith.constant 26 : i32
    %387 = arith.index_cast %c26_i32 : i32 to index
    %388 = memref.load %arg1[%387] : memref<53xf32, #tpu.memory_space<smem>>
    %389 = arith.index_cast %c26_i32 : i32 to index
    %390 = memref.load %arg2[%389] : memref<53xf32, #tpu.memory_space<smem>>
    %391 = vector.broadcast %388 : f32 to vector<8x128xf32>
    %392 = arith.cmpf olt, %391, %3 : vector<8x128xf32>
    %393 = arith.xori %377, %392 : vector<8x128xi1>
    %394 = vector.broadcast %373 : f32 to vector<8x128xf32>
    %395 = arith.select %393, %394, %380 : vector<8x128xi1>, vector<8x128xf32>
    %396 = vector.broadcast %375 : f32 to vector<8x128xf32>
    %397 = arith.select %393, %396, %382 : vector<8x128xi1>, vector<8x128xf32>
    %398 = vector.broadcast %388 : f32 to vector<8x128xf32>
    %399 = arith.select %393, %398, %384 : vector<8x128xi1>, vector<8x128xf32>
    %400 = vector.broadcast %390 : f32 to vector<8x128xf32>
    %401 = arith.select %393, %400, %386 : vector<8x128xi1>, vector<8x128xf32>
    %c27_i32 = arith.constant 27 : i32
    %402 = arith.index_cast %c27_i32 : i32 to index
    %403 = memref.load %arg1[%402] : memref<53xf32, #tpu.memory_space<smem>>
    %404 = arith.index_cast %c27_i32 : i32 to index
    %405 = memref.load %arg2[%404] : memref<53xf32, #tpu.memory_space<smem>>
    %406 = vector.broadcast %403 : f32 to vector<8x128xf32>
    %407 = arith.cmpf olt, %406, %3 : vector<8x128xf32>
    %408 = arith.xori %392, %407 : vector<8x128xi1>
    %409 = vector.broadcast %388 : f32 to vector<8x128xf32>
    %410 = arith.select %408, %409, %395 : vector<8x128xi1>, vector<8x128xf32>
    %411 = vector.broadcast %390 : f32 to vector<8x128xf32>
    %412 = arith.select %408, %411, %397 : vector<8x128xi1>, vector<8x128xf32>
    %413 = vector.broadcast %403 : f32 to vector<8x128xf32>
    %414 = arith.select %408, %413, %399 : vector<8x128xi1>, vector<8x128xf32>
    %415 = vector.broadcast %405 : f32 to vector<8x128xf32>
    %416 = arith.select %408, %415, %401 : vector<8x128xi1>, vector<8x128xf32>
    %c28_i32 = arith.constant 28 : i32
    %417 = arith.index_cast %c28_i32 : i32 to index
    %418 = memref.load %arg1[%417] : memref<53xf32, #tpu.memory_space<smem>>
    %419 = arith.index_cast %c28_i32 : i32 to index
    %420 = memref.load %arg2[%419] : memref<53xf32, #tpu.memory_space<smem>>
    %421 = vector.broadcast %418 : f32 to vector<8x128xf32>
    %422 = arith.cmpf olt, %421, %3 : vector<8x128xf32>
    %423 = arith.xori %407, %422 : vector<8x128xi1>
    %424 = vector.broadcast %403 : f32 to vector<8x128xf32>
    %425 = arith.select %423, %424, %410 : vector<8x128xi1>, vector<8x128xf32>
    %426 = vector.broadcast %405 : f32 to vector<8x128xf32>
    %427 = arith.select %423, %426, %412 : vector<8x128xi1>, vector<8x128xf32>
    %428 = vector.broadcast %418 : f32 to vector<8x128xf32>
    %429 = arith.select %423, %428, %414 : vector<8x128xi1>, vector<8x128xf32>
    %430 = vector.broadcast %420 : f32 to vector<8x128xf32>
    %431 = arith.select %423, %430, %416 : vector<8x128xi1>, vector<8x128xf32>
    %c29_i32 = arith.constant 29 : i32
    %432 = arith.index_cast %c29_i32 : i32 to index
    %433 = memref.load %arg1[%432] : memref<53xf32, #tpu.memory_space<smem>>
    %434 = arith.index_cast %c29_i32 : i32 to index
    %435 = memref.load %arg2[%434] : memref<53xf32, #tpu.memory_space<smem>>
    %436 = vector.broadcast %433 : f32 to vector<8x128xf32>
    %437 = arith.cmpf olt, %436, %3 : vector<8x128xf32>
    %438 = arith.xori %422, %437 : vector<8x128xi1>
    %439 = vector.broadcast %418 : f32 to vector<8x128xf32>
    %440 = arith.select %438, %439, %425 : vector<8x128xi1>, vector<8x128xf32>
    %441 = vector.broadcast %420 : f32 to vector<8x128xf32>
    %442 = arith.select %438, %441, %427 : vector<8x128xi1>, vector<8x128xf32>
    %443 = vector.broadcast %433 : f32 to vector<8x128xf32>
    %444 = arith.select %438, %443, %429 : vector<8x128xi1>, vector<8x128xf32>
    %445 = vector.broadcast %435 : f32 to vector<8x128xf32>
    %446 = arith.select %438, %445, %431 : vector<8x128xi1>, vector<8x128xf32>
    %c30_i32 = arith.constant 30 : i32
    %447 = arith.index_cast %c30_i32 : i32 to index
    %448 = memref.load %arg1[%447] : memref<53xf32, #tpu.memory_space<smem>>
    %449 = arith.index_cast %c30_i32 : i32 to index
    %450 = memref.load %arg2[%449] : memref<53xf32, #tpu.memory_space<smem>>
    %451 = vector.broadcast %448 : f32 to vector<8x128xf32>
    %452 = arith.cmpf olt, %451, %3 : vector<8x128xf32>
    %453 = arith.xori %437, %452 : vector<8x128xi1>
    %454 = vector.broadcast %433 : f32 to vector<8x128xf32>
    %455 = arith.select %453, %454, %440 : vector<8x128xi1>, vector<8x128xf32>
    %456 = vector.broadcast %435 : f32 to vector<8x128xf32>
    %457 = arith.select %453, %456, %442 : vector<8x128xi1>, vector<8x128xf32>
    %458 = vector.broadcast %448 : f32 to vector<8x128xf32>
    %459 = arith.select %453, %458, %444 : vector<8x128xi1>, vector<8x128xf32>
    %460 = vector.broadcast %450 : f32 to vector<8x128xf32>
    %461 = arith.select %453, %460, %446 : vector<8x128xi1>, vector<8x128xf32>
    %c31_i32 = arith.constant 31 : i32
    %462 = arith.index_cast %c31_i32 : i32 to index
    %463 = memref.load %arg1[%462] : memref<53xf32, #tpu.memory_space<smem>>
    %464 = arith.index_cast %c31_i32 : i32 to index
    %465 = memref.load %arg2[%464] : memref<53xf32, #tpu.memory_space<smem>>
    %466 = vector.broadcast %463 : f32 to vector<8x128xf32>
    %467 = arith.cmpf olt, %466, %3 : vector<8x128xf32>
    %468 = arith.xori %452, %467 : vector<8x128xi1>
    %469 = vector.broadcast %448 : f32 to vector<8x128xf32>
    %470 = arith.select %468, %469, %455 : vector<8x128xi1>, vector<8x128xf32>
    %471 = vector.broadcast %450 : f32 to vector<8x128xf32>
    %472 = arith.select %468, %471, %457 : vector<8x128xi1>, vector<8x128xf32>
    %473 = vector.broadcast %463 : f32 to vector<8x128xf32>
    %474 = arith.select %468, %473, %459 : vector<8x128xi1>, vector<8x128xf32>
    %475 = vector.broadcast %465 : f32 to vector<8x128xf32>
    %476 = arith.select %468, %475, %461 : vector<8x128xi1>, vector<8x128xf32>
    %c32_i32 = arith.constant 32 : i32
    %477 = arith.index_cast %c32_i32 : i32 to index
    %478 = memref.load %arg1[%477] : memref<53xf32, #tpu.memory_space<smem>>
    %479 = arith.index_cast %c32_i32 : i32 to index
    %480 = memref.load %arg2[%479] : memref<53xf32, #tpu.memory_space<smem>>
    %481 = vector.broadcast %478 : f32 to vector<8x128xf32>
    %482 = arith.cmpf olt, %481, %3 : vector<8x128xf32>
    %483 = arith.xori %467, %482 : vector<8x128xi1>
    %484 = vector.broadcast %463 : f32 to vector<8x128xf32>
    %485 = arith.select %483, %484, %470 : vector<8x128xi1>, vector<8x128xf32>
    %486 = vector.broadcast %465 : f32 to vector<8x128xf32>
    %487 = arith.select %483, %486, %472 : vector<8x128xi1>, vector<8x128xf32>
    %488 = vector.broadcast %478 : f32 to vector<8x128xf32>
    %489 = arith.select %483, %488, %474 : vector<8x128xi1>, vector<8x128xf32>
    %490 = vector.broadcast %480 : f32 to vector<8x128xf32>
    %491 = arith.select %483, %490, %476 : vector<8x128xi1>, vector<8x128xf32>
    %c33_i32 = arith.constant 33 : i32
    %492 = arith.index_cast %c33_i32 : i32 to index
    %493 = memref.load %arg1[%492] : memref<53xf32, #tpu.memory_space<smem>>
    %494 = arith.index_cast %c33_i32 : i32 to index
    %495 = memref.load %arg2[%494] : memref<53xf32, #tpu.memory_space<smem>>
    %496 = vector.broadcast %493 : f32 to vector<8x128xf32>
    %497 = arith.cmpf olt, %496, %3 : vector<8x128xf32>
    %498 = arith.xori %482, %497 : vector<8x128xi1>
    %499 = vector.broadcast %478 : f32 to vector<8x128xf32>
    %500 = arith.select %498, %499, %485 : vector<8x128xi1>, vector<8x128xf32>
    %501 = vector.broadcast %480 : f32 to vector<8x128xf32>
    %502 = arith.select %498, %501, %487 : vector<8x128xi1>, vector<8x128xf32>
    %503 = vector.broadcast %493 : f32 to vector<8x128xf32>
    %504 = arith.select %498, %503, %489 : vector<8x128xi1>, vector<8x128xf32>
    %505 = vector.broadcast %495 : f32 to vector<8x128xf32>
    %506 = arith.select %498, %505, %491 : vector<8x128xi1>, vector<8x128xf32>
    %c34_i32 = arith.constant 34 : i32
    %507 = arith.index_cast %c34_i32 : i32 to index
    %508 = memref.load %arg1[%507] : memref<53xf32, #tpu.memory_space<smem>>
    %509 = arith.index_cast %c34_i32 : i32 to index
    %510 = memref.load %arg2[%509] : memref<53xf32, #tpu.memory_space<smem>>
    %511 = vector.broadcast %508 : f32 to vector<8x128xf32>
    %512 = arith.cmpf olt, %511, %3 : vector<8x128xf32>
    %513 = arith.xori %497, %512 : vector<8x128xi1>
    %514 = vector.broadcast %493 : f32 to vector<8x128xf32>
    %515 = arith.select %513, %514, %500 : vector<8x128xi1>, vector<8x128xf32>
    %516 = vector.broadcast %495 : f32 to vector<8x128xf32>
    %517 = arith.select %513, %516, %502 : vector<8x128xi1>, vector<8x128xf32>
    %518 = vector.broadcast %508 : f32 to vector<8x128xf32>
    %519 = arith.select %513, %518, %504 : vector<8x128xi1>, vector<8x128xf32>
    %520 = vector.broadcast %510 : f32 to vector<8x128xf32>
    %521 = arith.select %513, %520, %506 : vector<8x128xi1>, vector<8x128xf32>
    %c35_i32 = arith.constant 35 : i32
    %522 = arith.index_cast %c35_i32 : i32 to index
    %523 = memref.load %arg1[%522] : memref<53xf32, #tpu.memory_space<smem>>
    %524 = arith.index_cast %c35_i32 : i32 to index
    %525 = memref.load %arg2[%524] : memref<53xf32, #tpu.memory_space<smem>>
    %526 = vector.broadcast %523 : f32 to vector<8x128xf32>
    %527 = arith.cmpf olt, %526, %3 : vector<8x128xf32>
    %528 = arith.xori %512, %527 : vector<8x128xi1>
    %529 = vector.broadcast %508 : f32 to vector<8x128xf32>
    %530 = arith.select %528, %529, %515 : vector<8x128xi1>, vector<8x128xf32>
    %531 = vector.broadcast %510 : f32 to vector<8x128xf32>
    %532 = arith.select %528, %531, %517 : vector<8x128xi1>, vector<8x128xf32>
    %533 = vector.broadcast %523 : f32 to vector<8x128xf32>
    %534 = arith.select %528, %533, %519 : vector<8x128xi1>, vector<8x128xf32>
    %535 = vector.broadcast %525 : f32 to vector<8x128xf32>
    %536 = arith.select %528, %535, %521 : vector<8x128xi1>, vector<8x128xf32>
    %c36_i32 = arith.constant 36 : i32
    %537 = arith.index_cast %c36_i32 : i32 to index
    %538 = memref.load %arg1[%537] : memref<53xf32, #tpu.memory_space<smem>>
    %539 = arith.index_cast %c36_i32 : i32 to index
    %540 = memref.load %arg2[%539] : memref<53xf32, #tpu.memory_space<smem>>
    %541 = vector.broadcast %538 : f32 to vector<8x128xf32>
    %542 = arith.cmpf olt, %541, %3 : vector<8x128xf32>
    %543 = arith.xori %527, %542 : vector<8x128xi1>
    %544 = vector.broadcast %523 : f32 to vector<8x128xf32>
    %545 = arith.select %543, %544, %530 : vector<8x128xi1>, vector<8x128xf32>
    %546 = vector.broadcast %525 : f32 to vector<8x128xf32>
    %547 = arith.select %543, %546, %532 : vector<8x128xi1>, vector<8x128xf32>
    %548 = vector.broadcast %538 : f32 to vector<8x128xf32>
    %549 = arith.select %543, %548, %534 : vector<8x128xi1>, vector<8x128xf32>
    %550 = vector.broadcast %540 : f32 to vector<8x128xf32>
    %551 = arith.select %543, %550, %536 : vector<8x128xi1>, vector<8x128xf32>
    %c37_i32 = arith.constant 37 : i32
    %552 = arith.index_cast %c37_i32 : i32 to index
    %553 = memref.load %arg1[%552] : memref<53xf32, #tpu.memory_space<smem>>
    %554 = arith.index_cast %c37_i32 : i32 to index
    %555 = memref.load %arg2[%554] : memref<53xf32, #tpu.memory_space<smem>>
    %556 = vector.broadcast %553 : f32 to vector<8x128xf32>
    %557 = arith.cmpf olt, %556, %3 : vector<8x128xf32>
    %558 = arith.xori %542, %557 : vector<8x128xi1>
    %559 = vector.broadcast %538 : f32 to vector<8x128xf32>
    %560 = arith.select %558, %559, %545 : vector<8x128xi1>, vector<8x128xf32>
    %561 = vector.broadcast %540 : f32 to vector<8x128xf32>
    %562 = arith.select %558, %561, %547 : vector<8x128xi1>, vector<8x128xf32>
    %563 = vector.broadcast %553 : f32 to vector<8x128xf32>
    %564 = arith.select %558, %563, %549 : vector<8x128xi1>, vector<8x128xf32>
    %565 = vector.broadcast %555 : f32 to vector<8x128xf32>
    %566 = arith.select %558, %565, %551 : vector<8x128xi1>, vector<8x128xf32>
    %c38_i32 = arith.constant 38 : i32
    %567 = arith.index_cast %c38_i32 : i32 to index
    %568 = memref.load %arg1[%567] : memref<53xf32, #tpu.memory_space<smem>>
    %569 = arith.index_cast %c38_i32 : i32 to index
    %570 = memref.load %arg2[%569] : memref<53xf32, #tpu.memory_space<smem>>
    %571 = vector.broadcast %568 : f32 to vector<8x128xf32>
    %572 = arith.cmpf olt, %571, %3 : vector<8x128xf32>
    %573 = arith.xori %557, %572 : vector<8x128xi1>
    %574 = vector.broadcast %553 : f32 to vector<8x128xf32>
    %575 = arith.select %573, %574, %560 : vector<8x128xi1>, vector<8x128xf32>
    %576 = vector.broadcast %555 : f32 to vector<8x128xf32>
    %577 = arith.select %573, %576, %562 : vector<8x128xi1>, vector<8x128xf32>
    %578 = vector.broadcast %568 : f32 to vector<8x128xf32>
    %579 = arith.select %573, %578, %564 : vector<8x128xi1>, vector<8x128xf32>
    %580 = vector.broadcast %570 : f32 to vector<8x128xf32>
    %581 = arith.select %573, %580, %566 : vector<8x128xi1>, vector<8x128xf32>
    %c39_i32 = arith.constant 39 : i32
    %582 = arith.index_cast %c39_i32 : i32 to index
    %583 = memref.load %arg1[%582] : memref<53xf32, #tpu.memory_space<smem>>
    %584 = arith.index_cast %c39_i32 : i32 to index
    %585 = memref.load %arg2[%584] : memref<53xf32, #tpu.memory_space<smem>>
    %586 = vector.broadcast %583 : f32 to vector<8x128xf32>
    %587 = arith.cmpf olt, %586, %3 : vector<8x128xf32>
    %588 = arith.xori %572, %587 : vector<8x128xi1>
    %589 = vector.broadcast %568 : f32 to vector<8x128xf32>
    %590 = arith.select %588, %589, %575 : vector<8x128xi1>, vector<8x128xf32>
    %591 = vector.broadcast %570 : f32 to vector<8x128xf32>
    %592 = arith.select %588, %591, %577 : vector<8x128xi1>, vector<8x128xf32>
    %593 = vector.broadcast %583 : f32 to vector<8x128xf32>
    %594 = arith.select %588, %593, %579 : vector<8x128xi1>, vector<8x128xf32>
    %595 = vector.broadcast %585 : f32 to vector<8x128xf32>
    %596 = arith.select %588, %595, %581 : vector<8x128xi1>, vector<8x128xf32>
    %c40_i32 = arith.constant 40 : i32
    %597 = arith.index_cast %c40_i32 : i32 to index
    %598 = memref.load %arg1[%597] : memref<53xf32, #tpu.memory_space<smem>>
    %599 = arith.index_cast %c40_i32 : i32 to index
    %600 = memref.load %arg2[%599] : memref<53xf32, #tpu.memory_space<smem>>
    %601 = vector.broadcast %598 : f32 to vector<8x128xf32>
    %602 = arith.cmpf olt, %601, %3 : vector<8x128xf32>
    %603 = arith.xori %587, %602 : vector<8x128xi1>
    %604 = vector.broadcast %583 : f32 to vector<8x128xf32>
    %605 = arith.select %603, %604, %590 : vector<8x128xi1>, vector<8x128xf32>
    %606 = vector.broadcast %585 : f32 to vector<8x128xf32>
    %607 = arith.select %603, %606, %592 : vector<8x128xi1>, vector<8x128xf32>
    %608 = vector.broadcast %598 : f32 to vector<8x128xf32>
    %609 = arith.select %603, %608, %594 : vector<8x128xi1>, vector<8x128xf32>
    %610 = vector.broadcast %600 : f32 to vector<8x128xf32>
    %611 = arith.select %603, %610, %596 : vector<8x128xi1>, vector<8x128xf32>
    %c41_i32 = arith.constant 41 : i32
    %612 = arith.index_cast %c41_i32 : i32 to index
    %613 = memref.load %arg1[%612] : memref<53xf32, #tpu.memory_space<smem>>
    %614 = arith.index_cast %c41_i32 : i32 to index
    %615 = memref.load %arg2[%614] : memref<53xf32, #tpu.memory_space<smem>>
    %616 = vector.broadcast %613 : f32 to vector<8x128xf32>
    %617 = arith.cmpf olt, %616, %3 : vector<8x128xf32>
    %618 = arith.xori %602, %617 : vector<8x128xi1>
    %619 = vector.broadcast %598 : f32 to vector<8x128xf32>
    %620 = arith.select %618, %619, %605 : vector<8x128xi1>, vector<8x128xf32>
    %621 = vector.broadcast %600 : f32 to vector<8x128xf32>
    %622 = arith.select %618, %621, %607 : vector<8x128xi1>, vector<8x128xf32>
    %623 = vector.broadcast %613 : f32 to vector<8x128xf32>
    %624 = arith.select %618, %623, %609 : vector<8x128xi1>, vector<8x128xf32>
    %625 = vector.broadcast %615 : f32 to vector<8x128xf32>
    %626 = arith.select %618, %625, %611 : vector<8x128xi1>, vector<8x128xf32>
    %c42_i32 = arith.constant 42 : i32
    %627 = arith.index_cast %c42_i32 : i32 to index
    %628 = memref.load %arg1[%627] : memref<53xf32, #tpu.memory_space<smem>>
    %629 = arith.index_cast %c42_i32 : i32 to index
    %630 = memref.load %arg2[%629] : memref<53xf32, #tpu.memory_space<smem>>
    %631 = vector.broadcast %628 : f32 to vector<8x128xf32>
    %632 = arith.cmpf olt, %631, %3 : vector<8x128xf32>
    %633 = arith.xori %617, %632 : vector<8x128xi1>
    %634 = vector.broadcast %613 : f32 to vector<8x128xf32>
    %635 = arith.select %633, %634, %620 : vector<8x128xi1>, vector<8x128xf32>
    %636 = vector.broadcast %615 : f32 to vector<8x128xf32>
    %637 = arith.select %633, %636, %622 : vector<8x128xi1>, vector<8x128xf32>
    %638 = vector.broadcast %628 : f32 to vector<8x128xf32>
    %639 = arith.select %633, %638, %624 : vector<8x128xi1>, vector<8x128xf32>
    %640 = vector.broadcast %630 : f32 to vector<8x128xf32>
    %641 = arith.select %633, %640, %626 : vector<8x128xi1>, vector<8x128xf32>
    %c43_i32 = arith.constant 43 : i32
    %642 = arith.index_cast %c43_i32 : i32 to index
    %643 = memref.load %arg1[%642] : memref<53xf32, #tpu.memory_space<smem>>
    %644 = arith.index_cast %c43_i32 : i32 to index
    %645 = memref.load %arg2[%644] : memref<53xf32, #tpu.memory_space<smem>>
    %646 = vector.broadcast %643 : f32 to vector<8x128xf32>
    %647 = arith.cmpf olt, %646, %3 : vector<8x128xf32>
    %648 = arith.xori %632, %647 : vector<8x128xi1>
    %649 = vector.broadcast %628 : f32 to vector<8x128xf32>
    %650 = arith.select %648, %649, %635 : vector<8x128xi1>, vector<8x128xf32>
    %651 = vector.broadcast %630 : f32 to vector<8x128xf32>
    %652 = arith.select %648, %651, %637 : vector<8x128xi1>, vector<8x128xf32>
    %653 = vector.broadcast %643 : f32 to vector<8x128xf32>
    %654 = arith.select %648, %653, %639 : vector<8x128xi1>, vector<8x128xf32>
    %655 = vector.broadcast %645 : f32 to vector<8x128xf32>
    %656 = arith.select %648, %655, %641 : vector<8x128xi1>, vector<8x128xf32>
    %c44_i32 = arith.constant 44 : i32
    %657 = arith.index_cast %c44_i32 : i32 to index
    %658 = memref.load %arg1[%657] : memref<53xf32, #tpu.memory_space<smem>>
    %659 = arith.index_cast %c44_i32 : i32 to index
    %660 = memref.load %arg2[%659] : memref<53xf32, #tpu.memory_space<smem>>
    %661 = vector.broadcast %658 : f32 to vector<8x128xf32>
    %662 = arith.cmpf olt, %661, %3 : vector<8x128xf32>
    %663 = arith.xori %647, %662 : vector<8x128xi1>
    %664 = vector.broadcast %643 : f32 to vector<8x128xf32>
    %665 = arith.select %663, %664, %650 : vector<8x128xi1>, vector<8x128xf32>
    %666 = vector.broadcast %645 : f32 to vector<8x128xf32>
    %667 = arith.select %663, %666, %652 : vector<8x128xi1>, vector<8x128xf32>
    %668 = vector.broadcast %658 : f32 to vector<8x128xf32>
    %669 = arith.select %663, %668, %654 : vector<8x128xi1>, vector<8x128xf32>
    %670 = vector.broadcast %660 : f32 to vector<8x128xf32>
    %671 = arith.select %663, %670, %656 : vector<8x128xi1>, vector<8x128xf32>
    %c45_i32 = arith.constant 45 : i32
    %672 = arith.index_cast %c45_i32 : i32 to index
    %673 = memref.load %arg1[%672] : memref<53xf32, #tpu.memory_space<smem>>
    %674 = arith.index_cast %c45_i32 : i32 to index
    %675 = memref.load %arg2[%674] : memref<53xf32, #tpu.memory_space<smem>>
    %676 = vector.broadcast %673 : f32 to vector<8x128xf32>
    %677 = arith.cmpf olt, %676, %3 : vector<8x128xf32>
    %678 = arith.xori %662, %677 : vector<8x128xi1>
    %679 = vector.broadcast %658 : f32 to vector<8x128xf32>
    %680 = arith.select %678, %679, %665 : vector<8x128xi1>, vector<8x128xf32>
    %681 = vector.broadcast %660 : f32 to vector<8x128xf32>
    %682 = arith.select %678, %681, %667 : vector<8x128xi1>, vector<8x128xf32>
    %683 = vector.broadcast %673 : f32 to vector<8x128xf32>
    %684 = arith.select %678, %683, %669 : vector<8x128xi1>, vector<8x128xf32>
    %685 = vector.broadcast %675 : f32 to vector<8x128xf32>
    %686 = arith.select %678, %685, %671 : vector<8x128xi1>, vector<8x128xf32>
    %c46_i32 = arith.constant 46 : i32
    %687 = arith.index_cast %c46_i32 : i32 to index
    %688 = memref.load %arg1[%687] : memref<53xf32, #tpu.memory_space<smem>>
    %689 = arith.index_cast %c46_i32 : i32 to index
    %690 = memref.load %arg2[%689] : memref<53xf32, #tpu.memory_space<smem>>
    %691 = vector.broadcast %688 : f32 to vector<8x128xf32>
    %692 = arith.cmpf olt, %691, %3 : vector<8x128xf32>
    %693 = arith.xori %677, %692 : vector<8x128xi1>
    %694 = vector.broadcast %673 : f32 to vector<8x128xf32>
    %695 = arith.select %693, %694, %680 : vector<8x128xi1>, vector<8x128xf32>
    %696 = vector.broadcast %675 : f32 to vector<8x128xf32>
    %697 = arith.select %693, %696, %682 : vector<8x128xi1>, vector<8x128xf32>
    %698 = vector.broadcast %688 : f32 to vector<8x128xf32>
    %699 = arith.select %693, %698, %684 : vector<8x128xi1>, vector<8x128xf32>
    %700 = vector.broadcast %690 : f32 to vector<8x128xf32>
    %701 = arith.select %693, %700, %686 : vector<8x128xi1>, vector<8x128xf32>
    %c47_i32 = arith.constant 47 : i32
    %702 = arith.index_cast %c47_i32 : i32 to index
    %703 = memref.load %arg1[%702] : memref<53xf32, #tpu.memory_space<smem>>
    %704 = arith.index_cast %c47_i32 : i32 to index
    %705 = memref.load %arg2[%704] : memref<53xf32, #tpu.memory_space<smem>>
    %706 = vector.broadcast %703 : f32 to vector<8x128xf32>
    %707 = arith.cmpf olt, %706, %3 : vector<8x128xf32>
    %708 = arith.xori %692, %707 : vector<8x128xi1>
    %709 = vector.broadcast %688 : f32 to vector<8x128xf32>
    %710 = arith.select %708, %709, %695 : vector<8x128xi1>, vector<8x128xf32>
    %711 = vector.broadcast %690 : f32 to vector<8x128xf32>
    %712 = arith.select %708, %711, %697 : vector<8x128xi1>, vector<8x128xf32>
    %713 = vector.broadcast %703 : f32 to vector<8x128xf32>
    %714 = arith.select %708, %713, %699 : vector<8x128xi1>, vector<8x128xf32>
    %715 = vector.broadcast %705 : f32 to vector<8x128xf32>
    %716 = arith.select %708, %715, %701 : vector<8x128xi1>, vector<8x128xf32>
    %c48_i32 = arith.constant 48 : i32
    %717 = arith.index_cast %c48_i32 : i32 to index
    %718 = memref.load %arg1[%717] : memref<53xf32, #tpu.memory_space<smem>>
    %719 = arith.index_cast %c48_i32 : i32 to index
    %720 = memref.load %arg2[%719] : memref<53xf32, #tpu.memory_space<smem>>
    %721 = vector.broadcast %718 : f32 to vector<8x128xf32>
    %722 = arith.cmpf olt, %721, %3 : vector<8x128xf32>
    %723 = arith.xori %707, %722 : vector<8x128xi1>
    %724 = vector.broadcast %703 : f32 to vector<8x128xf32>
    %725 = arith.select %723, %724, %710 : vector<8x128xi1>, vector<8x128xf32>
    %726 = vector.broadcast %705 : f32 to vector<8x128xf32>
    %727 = arith.select %723, %726, %712 : vector<8x128xi1>, vector<8x128xf32>
    %728 = vector.broadcast %718 : f32 to vector<8x128xf32>
    %729 = arith.select %723, %728, %714 : vector<8x128xi1>, vector<8x128xf32>
    %730 = vector.broadcast %720 : f32 to vector<8x128xf32>
    %731 = arith.select %723, %730, %716 : vector<8x128xi1>, vector<8x128xf32>
    %c49_i32 = arith.constant 49 : i32
    %732 = arith.index_cast %c49_i32 : i32 to index
    %733 = memref.load %arg1[%732] : memref<53xf32, #tpu.memory_space<smem>>
    %734 = arith.index_cast %c49_i32 : i32 to index
    %735 = memref.load %arg2[%734] : memref<53xf32, #tpu.memory_space<smem>>
    %736 = vector.broadcast %733 : f32 to vector<8x128xf32>
    %737 = arith.cmpf olt, %736, %3 : vector<8x128xf32>
    %738 = arith.xori %722, %737 : vector<8x128xi1>
    %739 = vector.broadcast %718 : f32 to vector<8x128xf32>
    %740 = arith.select %738, %739, %725 : vector<8x128xi1>, vector<8x128xf32>
    %741 = vector.broadcast %720 : f32 to vector<8x128xf32>
    %742 = arith.select %738, %741, %727 : vector<8x128xi1>, vector<8x128xf32>
    %743 = vector.broadcast %733 : f32 to vector<8x128xf32>
    %744 = arith.select %738, %743, %729 : vector<8x128xi1>, vector<8x128xf32>
    %745 = vector.broadcast %735 : f32 to vector<8x128xf32>
    %746 = arith.select %738, %745, %731 : vector<8x128xi1>, vector<8x128xf32>
    %c50_i32 = arith.constant 50 : i32
    %747 = arith.index_cast %c50_i32 : i32 to index
    %748 = memref.load %arg1[%747] : memref<53xf32, #tpu.memory_space<smem>>
    %749 = arith.index_cast %c50_i32 : i32 to index
    %750 = memref.load %arg2[%749] : memref<53xf32, #tpu.memory_space<smem>>
    %751 = vector.broadcast %748 : f32 to vector<8x128xf32>
    %752 = arith.cmpf olt, %751, %3 : vector<8x128xf32>
    %753 = arith.xori %737, %752 : vector<8x128xi1>
    %754 = vector.broadcast %733 : f32 to vector<8x128xf32>
    %755 = arith.select %753, %754, %740 : vector<8x128xi1>, vector<8x128xf32>
    %756 = vector.broadcast %735 : f32 to vector<8x128xf32>
    %757 = arith.select %753, %756, %742 : vector<8x128xi1>, vector<8x128xf32>
    %758 = vector.broadcast %748 : f32 to vector<8x128xf32>
    %759 = arith.select %753, %758, %744 : vector<8x128xi1>, vector<8x128xf32>
    %760 = vector.broadcast %750 : f32 to vector<8x128xf32>
    %761 = arith.select %753, %760, %746 : vector<8x128xi1>, vector<8x128xf32>
    %c51_i32 = arith.constant 51 : i32
    %762 = arith.index_cast %c51_i32 : i32 to index
    %763 = memref.load %arg1[%762] : memref<53xf32, #tpu.memory_space<smem>>
    %764 = arith.index_cast %c51_i32 : i32 to index
    %765 = memref.load %arg2[%764] : memref<53xf32, #tpu.memory_space<smem>>
    %766 = vector.broadcast %763 : f32 to vector<8x128xf32>
    %767 = arith.cmpf olt, %766, %3 : vector<8x128xf32>
    %768 = arith.xori %752, %767 : vector<8x128xi1>
    %769 = vector.broadcast %748 : f32 to vector<8x128xf32>
    %770 = arith.select %768, %769, %755 : vector<8x128xi1>, vector<8x128xf32>
    %771 = vector.broadcast %750 : f32 to vector<8x128xf32>
    %772 = arith.select %768, %771, %757 : vector<8x128xi1>, vector<8x128xf32>
    %773 = vector.broadcast %763 : f32 to vector<8x128xf32>
    %774 = arith.select %768, %773, %759 : vector<8x128xi1>, vector<8x128xf32>
    %775 = vector.broadcast %765 : f32 to vector<8x128xf32>
    %776 = arith.select %768, %775, %761 : vector<8x128xi1>, vector<8x128xf32>
    %c52_i32 = arith.constant 52 : i32
    %777 = arith.index_cast %c52_i32 : i32 to index
    %778 = memref.load %arg1[%777] : memref<53xf32, #tpu.memory_space<smem>>
    %779 = arith.index_cast %c52_i32 : i32 to index
    %780 = memref.load %arg2[%779] : memref<53xf32, #tpu.memory_space<smem>>
    %781 = vector.broadcast %778 : f32 to vector<8x128xf32>
    %782 = arith.cmpf olt, %781, %3 : vector<8x128xf32>
    %783 = arith.xori %767, %782 : vector<8x128xi1>
    %784 = vector.broadcast %763 : f32 to vector<8x128xf32>
    %785 = arith.select %783, %784, %770 : vector<8x128xi1>, vector<8x128xf32>
    %786 = vector.broadcast %765 : f32 to vector<8x128xf32>
    %787 = arith.select %783, %786, %772 : vector<8x128xi1>, vector<8x128xf32>
    %788 = vector.broadcast %778 : f32 to vector<8x128xf32>
    %789 = arith.select %783, %788, %774 : vector<8x128xi1>, vector<8x128xf32>
    %790 = vector.broadcast %780 : f32 to vector<8x128xf32>
    %791 = arith.select %783, %790, %776 : vector<8x128xi1>, vector<8x128xf32>
    %c52_i32_6 = arith.constant 52 : i32
    %792 = arith.subf %3, %785 : vector<8x128xf32>
    %793 = arith.subf %789, %3 : vector<8x128xf32>
    %794 = arith.mulf %787, %792 : vector<8x128xf32>
    %795 = arith.mulf %791, %793 : vector<8x128xf32>
    %796 = arith.addf %794, %795 : vector<8x128xf32>
    %797 = arith.addf %792, %793 : vector<8x128xf32>
    %798 = arith.divf %796, %797 : vector<8x128xf32>
    %799 = arith.minimumf %798, %791 : vector<8x128xf32>
    %800 = arith.maximumf %787, %799 : vector<8x128xf32>
    %cst_7 = arith.constant 0.00260416674 : f32
    %801 = vector.broadcast %cst_7 : f32 to vector<8x128xf32>
    %802 = arith.mulf %800, %801 : vector<8x128xf32>
    %cst_8 = arith.constant -2.73007631 : f32
    %803 = vector.broadcast %cst_8 : f32 to vector<8x128xf32>
    %804 = arith.cmpf ogt, %3, %803 : vector<8x128xf32>
    %cst_9 = arith.constant 2.68850398 : f32
    %805 = vector.broadcast %cst_9 : f32 to vector<8x128xf32>
    %806 = arith.cmpf olt, %3, %805 : vector<8x128xf32>
    %807 = arith.andi %804, %806 : vector<8x128xi1>
    %cst_10 = arith.constant -2.73007631 : f32
    %808 = vector.broadcast %cst_10 : f32 to vector<8x128xf32>
    %809 = arith.cmpf ogt, %3, %808 : vector<8x128xf32>
    %cst_11 = arith.constant 2.68850398 : f32
    %810 = vector.broadcast %cst_11 : f32 to vector<8x128xf32>
    %811 = arith.cmpf olt, %3, %810 : vector<8x128xf32>
    %812 = arith.andi %809, %811 : vector<8x128xi1>
    %813 = arith.andi %807, %812 : vector<8x128xi1>
    %cst_12 = arith.constant 2.68850398 : f32
    %814 = vector.broadcast %cst_12 : f32 to vector<8x128xf32>
    %815 = arith.cmpf oge, %3, %814 : vector<8x128xf32>
    %cst_13 = arith.constant 1.000000e+00 : f32
    %cst_14 = arith.constant 0.000000e+00 : f32
    %816 = vector.broadcast %cst_13 : f32 to vector<8x128xf32>
    %817 = vector.broadcast %cst_14 : f32 to vector<8x128xf32>
    %818 = arith.select %815, %816, %817 : vector<8x128xi1>, vector<8x128xf32>
    %819 = arith.select %813, %802, %818 : vector<8x128xi1>, vector<8x128xf32>
    %820 = arith.index_cast %1 : i32 to index
    %c0_15 = arith.constant 0 : index
    %821 = vector.load %arg4[%820, %c0_15] : memref<8x128xf32, #tpu.memory_space<vmem>>, vector<8x128xf32>
    tpu.vector_store %arg4[%820, %c0_15], %819 {strides = array<i32>} : memref<8x128xf32, #tpu.memory_space<vmem>>, vector<8x128xf32>,
    %c1_i32_16 = arith.constant 1 : i32
    return
  }
  func.func @transform_0(%arg0: i32, %arg1: memref<53xf32, #tpu.memory_space<smem>>, %arg2: memref<53xf32, #tpu.memory_space<smem>>) -> (i32, i32) {
    %c0_i32 = arith.constant 0 : i32
    %c0_i32_0 = arith.constant 0 : i32
    return %arg0, %c0_i32 : i32, i32
  }
  func.func @transform_1(%arg0: i32, %arg1: memref<53xf32, #tpu.memory_space<smem>>, %arg2: memref<53xf32, #tpu.memory_space<smem>>) -> (i32, i32) {
    %c0_i32 = arith.constant 0 : i32
    %c0_i32_0 = arith.constant 0 : i32
    return %arg0, %c0_i32 : i32, i32
  }
}

</mosaic_0001>

<llo_original>
// kernel: tpu_custom_call.1
$region0: #{tpu_custom_call.1}
  #allocation0 [shape = 'u32[]', space=smem, size = 0x4, offset = 0x4, fixed_abs, tag = 'smem constant byte address 0x4 - core index']
  #allocation1 [shape = 'u32[144,128]{1,0:T(1,128)}', space=vmem, size = 0x12000, scoped, tag = 'internal scratch']
  #allocation2 [shape = 's32[1]{0}', space=sflag, size = 0x4, scoped, tag = 'scoped memory for tpu_custom_call.1']
  #allocation3 [shape = 'u8[512]{0}', space=smem, size = 0x200, scoped, tag = 'prefetched SMEM operand 0']
  #allocation4 [shape = 'u8[512]{0}', space=smem, size = 0x200, scoped, tag = 'prefetched SMEM operand 1']
  %s0 = inlined_call_operand.hbm [shape: f32[53], index: 0, kind: input, shape index: {}]
  %s1 = inlined_call_operand.vmem [shape: f32[53], index: 1, kind: input, shape index: {}]
  %s2 = inlined_call_operand.hbm [shape: f32[16,128], index: 2, kind: input, shape index: {}]
  %s3 = inlined_call_operand.hbm [shape: f32[16,128], index: 3, kind: output, shape index: {}]
  %s4 = sld [smem:[#allocation0]]
  $region41: #{tpu_custom_call.1} parent=0
    _
  %s6 = ssub.s32 1, %s4
  %s7 = scalar_select 0, %s6, %s4
  %9 = dma.hbm_to_smem %s0, 16, [#allocation3], [#allocation2]
  %s10 = sshll.u32 %s1, 4
  %s11 = int_to_ptr.vmem [resolvable:$true] %s10
  %13 = dma.vmem_to_smem %s11, 16, [#allocation4], [#allocation2]
  %14 = dma.done [#allocation2], 32
  %15 = sfence
  $region1: #{tpu_custom_call.1} parent=0
    #allocation5 [shape = 'u8[8192]{0}', space=vmem, size = 0x2000, scoped, tag = 'input window, operand 2']
    #allocation6 [shape = 's32[2]{0}', space=sflag, size = 0x8, scoped, tag = 'scoped memory for tpu_custom_call.1']
    #allocation7 [shape = 's32[2]{0}', space=sflag, size = 0x8, scoped, tag = 'scoped memory for tpu_custom_call.1']
    #allocation8 [shape = 'u8[8192]{0}', space=vmem, size = 0x2000, scoped, tag = 'output window, operand 0']
    %16 = vsyncpa [#allocation6], 0
    %s17 = scalar_lea.sflag [#allocation6], 1
    %18 = vsyncpa %s17, 0
    %19 = vsyncpa [#allocation7], 0
    %s20 = scalar_lea.sflag [#allocation7], 1
    %21 = vsyncpa %s20, 0
    loop: start=0, step=1, limit=4
    $region2: #{tpu_custom_call.1} parent=1 // loop_pre_header
      _
    $region3: #{tpu_custom_call.1} parent=1 // loop_header
      %s23 = sphi 0, %s27
      %p24 = scmp.ge.s32.totalorder %s23, 4
      %s33 = sphi 0, %s35
      %s36 = sphi 0, %s33
      %s37 = sphi 0, %s36
      %s53 = sphi 0, %s37
      %s59 = sphi 0, %s61
      %s62 = sphi 0, %s59
      %s63 = sphi 0, %s62
      %s79 = sphi 0, %s63
    $region4: #{tpu_custom_call.1} parent=1 // loop_header_branch
      %26 = sbr.rel (%p24) target = $region8
    $region5: #{tpu_custom_call.1} parent=1 // loop_body
      %s28 = ssub.s32 %s23, 1
      %s29 = ssub.s32 %s23, 2
      %s30 = sadd.s32 %s23, 1
      %s31 = ssub.s32 %s23, %s30
      %p32 = scmp.eq.s32.totalorder %s31, 0
      %s34 = sadd.s32 %s33, 1
      %s35 = scalar_select %p32, %s33, %s34
      %p38 = pneg %p32
      %p39 = scmp.eq.s32.totalorder %s23, 1
      %p40 = por %p38, %p39
      %p41 = scmp.ne.s32.totalorder %s33, %s36
      %p42 = scmp.eq.s32.totalorder %s23, 0
      %p43 = por %p41, %p42
      %p44 = scmp.ne.s32.totalorder %s33, %s36
      %p45 = scmp.eq.s32.totalorder %s28, 1
      %p46 = por %p44, %p45
      %p47 = scmp.ne.s32.totalorder %s36, %s37
      %p48 = scmp.eq.s32.totalorder %s28, 0
      %p49 = por %p47, %p48
      %p50 = scmp.ne.s32.totalorder %s36, %s37
      %p51 = scmp.eq.s32.totalorder %s29, 1
      %p52 = por %p50, %p51
      %p54 = scmp.ne.s32.totalorder %s37, %s53
      %p55 = scmp.eq.s32.totalorder %s29, 0
      %p56 = por %p54, %p55
      %s57 = ssub.s32 %s23, %s30
      %p58 = scmp.eq.s32.totalorder %s57, 0
      %s60 = sadd.s32 %s59, 1
      %s61 = scalar_select %p58, %s59, %s60
      %p64 = pneg %p58
      %p65 = scmp.eq.s32.totalorder %s23, 1
      %p66 = por %p64, %p65
      %p67 = scmp.ne.s32.totalorder %s59, %s62
      %p68 = scmp.eq.s32.totalorder %s23, 0
      %p69 = por %p67, %p68
      %p70 = scmp.ne.s32.totalorder %s59, %s62
      %p71 = scmp.eq.s32.totalorder %s28, 1
      %p72 = por %p70, %p71
      %p73 = scmp.ne.s32.totalorder %s62, %s63
      %p74 = scmp.eq.s32.totalorder %s28, 0
      %p75 = por %p73, %p74
      %p76 = scmp.ne.s32.totalorder %s62, %s63
      %p77 = scmp.eq.s32.totalorder %s29, 1
      %p78 = por %p76, %p77
      %p80 = scmp.ne.s32.totalorder %s63, %s79
      %p81 = scmp.eq.s32.totalorder %s29, 0
      %p82 = por %p80, %p81
      %p83 = scmp.le.s32.totalorder 1, %s23
      %p84 = scmp.lt.s32.totalorder %s23, 3
      %p85 = pnand %p83, %p84
      %p86 = pneg %p85
      // Predicated region
      $region9: #{tpu_custom_call.1} parent=5 // pred_check
        _
      $region10: #{tpu_custom_call.1} parent=5 // pred_check_branch
        %88 = sbr.rel (%p85) target = $region12
      $region11: #{tpu_custom_call.1} parent=5 // pred_region
        %s89 = ssub.s32 %s23, 1
      $region12: #{tpu_custom_call.1} parent=5 // pred_fallthru
        _
      %p90 = scmp.lt.s32.totalorder %s23, 2
      // Predicated region
      $region13: #{tpu_custom_call.1} parent=5 // pred_check
        %p91 = pneg %p90
      $region14: #{tpu_custom_call.1} parent=5 // pred_check_branch
        %93 = sbr.rel (%p91) target = $region16
      $region15: #{tpu_custom_call.1} parent=5 // pred_region
        // Predicated region
        $region17: #{tpu_custom_call.1} parent=15 // pred_check
          %p94 = pneg %p43
        $region18: #{tpu_custom_call.1} parent=15 // pred_check_branch
          %96 = sbr.rel (%p94) target = $region20
        $region19: #{tpu_custom_call.1} parent=15 // pred_region
          %s97 = sand.u32 %s33, 1
          %s98 = scalar_lea.sflag [#allocation6], %s97
          %s99 = sand.u32 %s33, 1
          %s100 = smul.addr %s99, 8
          %s101 = scalar_lea.vmem [#allocation5], %s100
          %s103 = ssub.s32 128, 128
          %104 = vsyncadd %s98, %s103
          %s105 = smul.addr %s23, 128
          %s106 = scalar_lea.hbm %s2, %s105
          %s108 = sshll.u32 %s101, 4
          %s109 = int_to_ptr.vmem [resolvable:$true] %s108
          %111 = dma.hbm_to_vmem [thread:$0]  %s106, 128, %s109, %s98
        $region20: #{tpu_custom_call.1} parent=15 // pred_fallthru
          _
      $region16: #{tpu_custom_call.1} parent=5 // pred_fallthru
        _
      %p112 = scmp.le.s32.totalorder 1, %s23
      %p113 = scmp.lt.s32.totalorder %s23, 3
      %p114 = pnand %p112, %p113
      %p115 = pneg %p114
      // Predicated region
      $region21: #{tpu_custom_call.1} parent=5 // pred_check
        _
      $region22: #{tpu_custom_call.1} parent=5 // pred_check_branch
        %117 = sbr.rel (%p114) target = $region24
      $region23: #{tpu_custom_call.1} parent=5 // pred_region
        %s118 = ssub.s32 %s23, 1
        %s119 = sand.u32 %s36, 1
        %s120 = scalar_lea.sflag [#allocation6], %s119
        %s121 = sand.u32 %s36, 1
        %s122 = smul.addr %s121, 8
        %s123 = scalar_lea.vmem [#allocation5], %s122
        // Predicated region
        $region25: #{tpu_custom_call.1} parent=23 // pred_check
          %p124 = pneg %p49
        $region26: #{tpu_custom_call.1} parent=23 // pred_check_branch
          %126 = sbr.rel (%p124) target = $region28
        $region27: #{tpu_custom_call.1} parent=23 // pred_region
          %127 = dma.done %s120, 128
        $region28: #{tpu_custom_call.1} parent=23 // pred_fallthru
          _
        %s128 = sand.u32 %s36, 1
        %s129 = scalar_lea.sflag [#allocation6], %s128
        %s130 = sand.u32 %s36, 1
        %s131 = smul.addr %s130, 8
        %s132 = scalar_lea.vmem [#allocation5], %s131
        %p133 = pneg %p49
        %p134 = pneg %p46
        %p135 = pneg %p75
        %p136 = pneg %p72
        %s137 = sand.u32 %s62, 1
        %s138 = scalar_lea.sflag [#allocation7], %s137
        %s139 = sand.u32 %s62, 1
        %s140 = smul.addr %s139, 8
        %s141 = scalar_lea.vmem [#allocation8], %s140
        %v142 = vld [vmem:[%s123] sm:$0xff]
        %s143 = sld [smem:[#allocation3]]
        %s144 = sld [smem:[#allocation4]]
        %v145 = vstv %s143
        %vm146 = vcmp.lt.f32.partialorder %v145, %v142
        %s147 = sld [smem:[#allocation3 + $0x1]]
        %s148 = sld [smem:[#allocation4 + $0x1]]
        %v149 = vstv %s147
        %vm150 = vcmp.lt.f32.partialorder %v149, %v142
        %vm151 = vmxor %vm146, %vm150
        %v152 = vsel %vm151, %v145, -1e+30
        %v153 = vstv %s144
        %v154 = vsel %vm151, %v153, 0.0
        %v155 = vsel %vm151, %v149, 1e+30
        %v156 = vstv %s148
        %v157 = vsel %vm151, %v156, 0.0
        %s158 = sld [smem:[#allocation3 + $0x2]]
        %s159 = sld [smem:[#allocation4 + $0x2]]
        %v160 = vstv %s158
        %vm161 = vcmp.lt.f32.partialorder %v160, %v142
        %vm162 = vmxor %vm150, %vm161
        %v163 = vsel %vm162, %v149, %v152
        %v164 = vsel %vm162, %v156, %v154
        %v165 = vsel %vm162, %v160, %v155
        %v166 = vstv %s159
        %v167 = vsel %vm162, %v166, %v157
        %s168 = sld [smem:[#allocation3 + $0x3]]
        %s169 = sld [smem:[#allocation4 + $0x3]]
        %v170 = vstv %s168
        %vm171 = vcmp.lt.f32.partialorder %v170, %v142
        %vm172 = vmxor %vm161, %vm171
        %v173 = vsel %vm172, %v160, %v163
        %v174 = vsel %vm172, %v166, %v164
        %v175 = vsel %vm172, %v170, %v165
        %v176 = vstv %s169
        %v177 = vsel %vm172, %v176, %v167
        %s178 = sld [smem:[#allocation3 + $0x4]]
        %s179 = sld [smem:[#allocation4 + $0x4]]
        %v180 = vstv %s178
        %vm181 = vcmp.lt.f32.partialorder %v180, %v142
        %vm182 = vmxor %vm171, %vm181
        %v183 = vsel %vm182, %v170, %v173
        %v184 = vsel %vm182, %v176, %v174
        %v185 = vsel %vm182, %v180, %v175
        %v186 = vstv %s179
        %v187 = vsel %vm182, %v186, %v177
        %s188 = sld [smem:[#allocation3 + $0x5]]
        %s189 = sld [smem:[#allocation4 + $0x5]]
        %v190 = vstv %s188
        %vm191 = vcmp.lt.f32.partialorder %v190, %v142
        %vm192 = vmxor %vm181, %vm191
        %v193 = vsel %vm192, %v180, %v183
        %v194 = vsel %vm192, %v186, %v184
        %v195 = vsel %vm192, %v190, %v185
        %v196 = vstv %s189
        %v197 = vsel %vm192, %v196, %v187
        %s198 = sld [smem:[#allocation3 + $0x6]]
        %s199 = sld [smem:[#allocation4 + $0x6]]
        %v200 = vstv %s198
        %vm201 = vcmp.lt.f32.partialorder %v200, %v142
        %vm202 = vmxor %vm191, %vm201
        %v203 = vsel %vm202, %v190, %v193
        %v204 = vsel %vm202, %v196, %v194
        %v205 = vsel %vm202, %v200, %v195
        %v206 = vstv %s199
        %v207 = vsel %vm202, %v206, %v197
        %s208 = sld [smem:[#allocation3 + $0x7]]
        %s209 = sld [smem:[#allocation4 + $0x7]]
        %v210 = vstv %s208
        %vm211 = vcmp.lt.f32.partialorder %v210, %v142
        %vm212 = vmxor %vm201, %vm211
        %v213 = vsel %vm212, %v200, %v203
        %v214 = vsel %vm212, %v206, %v204
        %v215 = vsel %vm212, %v210, %v205
        %v216 = vstv %s209
        %v217 = vsel %vm212, %v216, %v207
        %s218 = sld [smem:[#allocation3 + $0x8]]
        %s219 = sld [smem:[#allocation4 + $0x8]]
        %v220 = vstv %s218
        %vm221 = vcmp.lt.f32.partialorder %v220, %v142
        %vm222 = vmxor %vm211, %vm221
        %v223 = vsel %vm222, %v210, %v213
        %v224 = vsel %vm222, %v216, %v214
        %v225 = vsel %vm222, %v220, %v215
        %v226 = vstv %s219
        %v227 = vsel %vm222, %v226, %v217
        %s228 = sld [smem:[#allocation3 + $0x9]]
        %s229 = sld [smem:[#allocation4 + $0x9]]
        %v230 = vstv %s228
        %vm231 = vcmp.lt.f32.partialorder %v230, %v142
        %vm232 = vmxor %vm221, %vm231
        %v233 = vsel %vm232, %v220, %v223
        %v234 = vsel %vm232, %v226, %v224
        %v235 = vsel %vm232, %v230, %v225
        %v236 = vstv %s229
        %v237 = vsel %vm232, %v236, %v227
        %s238 = sld [smem:[#allocation3 + $0xa]]
        %s239 = sld [smem:[#allocation4 + $0xa]]
        %v240 = vstv %s238
        %vm241 = vcmp.lt.f32.partialorder %v240, %v142
        %vm242 = vmxor %vm231, %vm241
        %v243 = vsel %vm242, %v230, %v233
        %v244 = vsel %vm242, %v236, %v234
        %v245 = vsel %vm242, %v240, %v235
        %v246 = vstv %s239
        %v247 = vsel %vm242, %v246, %v237
        %s248 = sld [smem:[#allocation3 + $0xb]]
        %s249 = sld [smem:[#allocation4 + $0xb]]
        %v250 = vstv %s248
        %vm251 = vcmp.lt.f32.partialorder %v250, %v142
        %vm252 = vmxor %vm241, %vm251
        %v253 = vsel %vm252, %v240, %v243
        %v254 = vsel %vm252, %v246, %v244
        %v255 = vsel %vm252, %v250, %v245
        %v256 = vstv %s249
        %v257 = vsel %vm252, %v256, %v247
        %s258 = sld [smem:[#allocation3 + $0xc]]
        %s259 = sld [smem:[#allocation4 + $0xc]]
        %v260 = vstv %s258
        %vm261 = vcmp.lt.f32.partialorder %v260, %v142
        %vm262 = vmxor %vm251, %vm261
        %v263 = vsel %vm262, %v250, %v253
        %v264 = vsel %vm262, %v256, %v254
        %v265 = vsel %vm262, %v260, %v255
        %v266 = vstv %s259
        %v267 = vsel %vm262, %v266, %v257
        %s268 = sld [smem:[#allocation3 + $0xd]]
        %s269 = sld [smem:[#allocation4 + $0xd]]
        %v270 = vstv %s268
        %vm271 = vcmp.lt.f32.partialorder %v270, %v142
        %vm272 = vmxor %vm261, %vm271
        %v273 = vsel %vm272, %v260, %v263
        %v274 = vsel %vm272, %v266, %v264
        %v275 = vsel %vm272, %v270, %v265
        %v276 = vstv %s269
        %v277 = vsel %vm272, %v276, %v267
        %s278 = sld [smem:[#allocation3 + $0xe]]
        %s279 = sld [smem:[#allocation4 + $0xe]]
        %v280 = vstv %s278
        %vm281 = vcmp.lt.f32.partialorder %v280, %v142
        %vm282 = vmxor %vm271, %vm281
        %v283 = vsel %vm282, %v270, %v273
        %v284 = vsel %vm282, %v276, %v274
        %v285 = vsel %vm282, %v280, %v275
        %v286 = vstv %s279
        %v287 = vsel %vm282, %v286, %v277
        %s288 = sld [smem:[#allocation3 + $0xf]]
        %s289 = sld [smem:[#allocation4 + $0xf]]
        %v290 = vstv %s288
        %vm291 = vcmp.lt.f32.partialorder %v290, %v142
        %vm292 = vmxor %vm281, %vm291
        %v293 = vsel %vm292, %v280, %v283
        %v294 = vsel %vm292, %v286, %v284
        %v295 = vsel %vm292, %v290, %v285
        %v296 = vstv %s289
        %v297 = vsel %vm292, %v296, %v287
        %s298 = sld [smem:[#allocation3 + $0x10]]
        %s299 = sld [smem:[#allocation4 + $0x10]]
        %v300 = vstv %s298
        %vm301 = vcmp.lt.f32.partialorder %v300, %v142
        %vm302 = vmxor %vm291, %vm301
        %v303 = vsel %vm302, %v290, %v293
        %v304 = vsel %vm302, %v296, %v294
        %v305 = vsel %vm302, %v300, %v295
        %v306 = vstv %s299
        %v307 = vsel %vm302, %v306, %v297
        %s308 = sld [smem:[#allocation3 + $0x11]]
        %s309 = sld [smem:[#allocation4 + $0x11]]
        %v310 = vstv %s308
        %vm311 = vcmp.lt.f32.partialorder %v310, %v142
        %vm312 = vmxor %vm301, %vm311
        %v313 = vsel %vm312, %v300, %v303
        %v314 = vsel %vm312, %v306, %v304
        %v315 = vsel %vm312, %v310, %v305
        %v316 = vstv %s309
        %v317 = vsel %vm312, %v316, %v307
        %s318 = sld [smem:[#allocation3 + $0x12]]
        %s319 = sld [smem:[#allocation4 + $0x12]]
        %v320 = vstv %s318
        %vm321 = vcmp.lt.f32.partialorder %v320, %v142
        %vm322 = vmxor %vm311, %vm321
        %v323 = vsel %vm322, %v310, %v313
        %v324 = vsel %vm322, %v316, %v314
        %v325 = vsel %vm322, %v320, %v315
        %v326 = vstv %s319
        %v327 = vsel %vm322, %v326, %v317
        %s328 = sld [smem:[#allocation3 + $0x13]]
        %s329 = sld [smem:[#allocation4 + $0x13]]
        %v330 = vstv %s328
        %vm331 = vcmp.lt.f32.partialorder %v330, %v142
        %vm332 = vmxor %vm321, %vm331
        %v333 = vsel %vm332, %v320, %v323
        %v334 = vsel %vm332, %v326, %v324
        %v335 = vsel %vm332, %v330, %v325
        %v336 = vstv %s329
        %v337 = vsel %vm332, %v336, %v327
        %s338 = sld [smem:[#allocation3 + $0x14]]
        %s339 = sld [smem:[#allocation4 + $0x14]]
        %v340 = vstv %s338
        %vm341 = vcmp.lt.f32.partialorder %v340, %v142
        %vm342 = vmxor %vm331, %vm341
        %v343 = vsel %vm342, %v330, %v333
        %v344 = vsel %vm342, %v336, %v334
        %v345 = vsel %vm342, %v340, %v335
        %v346 = vstv %s339
        %v347 = vsel %vm342, %v346, %v337
        %s348 = sld [smem:[#allocation3 + $0x15]]
        %s349 = sld [smem:[#allocation4 + $0x15]]
        %v350 = vstv %s348
        %vm351 = vcmp.lt.f32.partialorder %v350, %v142
        %vm352 = vmxor %vm341, %vm351
        %v353 = vsel %vm352, %v340, %v343
        %v354 = vsel %vm352, %v346, %v344
        %v355 = vsel %vm352, %v350, %v345
        %v356 = vstv %s349
        %v357 = vsel %vm352, %v356, %v347
        %s358 = sld [smem:[#allocation3 + $0x16]]
        %s359 = sld [smem:[#allocation4 + $0x16]]
        %v360 = vstv %s358
        %vm361 = vcmp.lt.f32.partialorder %v360, %v142
        %vm362 = vmxor %vm351, %vm361
        %v363 = vsel %vm362, %v350, %v353
        %v364 = vsel %vm362, %v356, %v354
        %v365 = vsel %vm362, %v360, %v355
        %v366 = vstv %s359
        %v367 = vsel %vm362, %v366, %v357
        %s368 = sld [smem:[#allocation3 + $0x17]]
        %s369 = sld [smem:[#allocation4 + $0x17]]
        %v370 = vstv %s368
        %vm371 = vcmp.lt.f32.partialorder %v370, %v142
        %vm372 = vmxor %vm361, %vm371
        %v373 = vsel %vm372, %v360, %v363
        %v374 = vsel %vm372, %v366, %v364
        %v375 = vsel %vm372, %v370, %v365
        %v376 = vstv %s369
        %v377 = vsel %vm372, %v376, %v367
        %s378 = sld [smem:[#allocation3 + $0x18]]
        %s379 = sld [smem:[#allocation4 + $0x18]]
        %v380 = vstv %s378
        %vm381 = vcmp.lt.f32.partialorder %v380, %v142
        %vm382 = vmxor %vm371, %vm381
        %v383 = vsel %vm382, %v370, %v373
        %v384 = vsel %vm382, %v376, %v374
        %v385 = vsel %vm382, %v380, %v375
        %v386 = vstv %s379
        %v387 = vsel %vm382, %v386, %v377
        %s388 = sld [smem:[#allocation3 + $0x19]]
        %s389 = sld [smem:[#allocation4 + $0x19]]
        %v390 = vstv %s388
        %vm391 = vcmp.lt.f32.partialorder %v390, %v142
        %vm392 = vmxor %vm381, %vm391
        %v393 = vsel %vm392, %v380, %v383
        %v394 = vsel %vm392, %v386, %v384
        %v395 = vsel %vm392, %v390, %v385
        %v396 = vstv %s389
        %v397 = vsel %vm392, %v396, %v387
        %s398 = sld [smem:[#allocation3 + $0x1a]]
        %s399 = sld [smem:[#allocation4 + $0x1a]]
        %v400 = vstv %s398
        %vm401 = vcmp.lt.f32.partialorder %v400, %v142
        %vm402 = vmxor %vm391, %vm401
        %v403 = vsel %vm402, %v390, %v393
        %v404 = vsel %vm402, %v396, %v394
        %v405 = vsel %vm402, %v400, %v395
        %v406 = vstv %s399
        %v407 = vsel %vm402, %v406, %v397
        %s408 = sld [smem:[#allocation3 + $0x1b]]
        %s409 = sld [smem:[#allocation4 + $0x1b]]
        %v410 = vstv %s408
        %vm411 = vcmp.lt.f32.partialorder %v410, %v142
        %vm412 = vmxor %vm401, %vm411
        %v413 = vsel %vm412, %v400, %v403
        %v414 = vsel %vm412, %v406, %v404
        %v415 = vsel %vm412, %v410, %v405
        %v416 = vstv %s409
        %v417 = vsel %vm412, %v416, %v407
        %s418 = sld [smem:[#allocation3 + $0x1c]]
        %s419 = sld [smem:[#allocation4 + $0x1c]]
        %v420 = vstv %s418
        %vm421 = vcmp.lt.f32.partialorder %v420, %v142
        %vm422 = vmxor %vm411, %vm421
        %v423 = vsel %vm422, %v410, %v413
        %v424 = vsel %vm422, %v416, %v414
        %v425 = vsel %vm422, %v420, %v415
        %v426 = vstv %s419
        %v427 = vsel %vm422, %v426, %v417
        %s428 = sld [smem:[#allocation3 + $0x1d]]
        %s429 = sld [smem:[#allocation4 + $0x1d]]
        %v430 = vstv %s428
        %vm431 = vcmp.lt.f32.partialorder %v430, %v142
        %vm432 = vmxor %vm421, %vm431
        %v433 = vsel %vm432, %v420, %v423
        %v434 = vsel %vm432, %v426, %v424
        %v435 = vsel %vm432, %v430, %v425
        %v436 = vstv %s429
        %v437 = vsel %vm432, %v436, %v427
        %s438 = sld [smem:[#allocation3 + $0x1e]]
        %s439 = sld [smem:[#allocation4 + $0x1e]]
        %v440 = vstv %s438
        %vm441 = vcmp.lt.f32.partialorder %v440, %v142
        %vm442 = vmxor %vm431, %vm441
        %v443 = vsel %vm442, %v430, %v433
        %v444 = vsel %vm442, %v436, %v434
        %v445 = vsel %vm442, %v440, %v435
        %v446 = vstv %s439
        %v447 = vsel %vm442, %v446, %v437
        %s448 = sld [smem:[#allocation3 + $0x1f]]
        %s449 = sld [smem:[#allocation4 + $0x1f]]
        %v450 = vstv %s448
        %vm451 = vcmp.lt.f32.partialorder %v450, %v142
        %vm452 = vmxor %vm441, %vm451
        %v453 = vsel %vm452, %v440, %v443
        %v454 = vsel %vm452, %v446, %v444
        %v455 = vsel %vm452, %v450, %v445
        %v456 = vstv %s449
        %v457 = vsel %vm452, %v456, %v447
        %s458 = sld [smem:[#allocation3 + $0x20]]
        %s459 = sld [smem:[#allocation4 + $0x20]]
        %v460 = vstv %s458
        %vm461 = vcmp.lt.f32.partialorder %v460, %v142
        %vm462 = vmxor %vm451, %vm461
        %v463 = vsel %vm462, %v450, %v453
        %v464 = vsel %vm462, %v456, %v454
        %v465 = vsel %vm462, %v460, %v455
        %v466 = vstv %s459
        %v467 = vsel %vm462, %v466, %v457
        %s468 = sld [smem:[#allocation3 + $0x21]]
        %s469 = sld [smem:[#allocation4 + $0x21]]
        %v470 = vstv %s468
        %vm471 = vcmp.lt.f32.partialorder %v470, %v142
        %vm472 = vmxor %vm461, %vm471
        %v473 = vsel %vm472, %v460, %v463
        %v474 = vsel %vm472, %v466, %v464
        %v475 = vsel %vm472, %v470, %v465
        %v476 = vstv %s469
        %v477 = vsel %vm472, %v476, %v467
        %s478 = sld [smem:[#allocation3 + $0x22]]
        %s479 = sld [smem:[#allocation4 + $0x22]]
        %v480 = vstv %s478
        %vm481 = vcmp.lt.f32.partialorder %v480, %v142
        %vm482 = vmxor %vm471, %vm481
        %v483 = vsel %vm482, %v470, %v473
        %v484 = vsel %vm482, %v476, %v474
        %v485 = vsel %vm482, %v480, %v475
        %v486 = vstv %s479
        %v487 = vsel %vm482, %v486, %v477
        %s488 = sld [smem:[#allocation3 + $0x23]]
        %s489 = sld [smem:[#allocation4 + $0x23]]
        %v490 = vstv %s488
        %vm491 = vcmp.lt.f32.partialorder %v490, %v142
        %vm492 = vmxor %vm481, %vm491
        %v493 = vsel %vm492, %v480, %v483
        %v494 = vsel %vm492, %v486, %v484
        %v495 = vsel %vm492, %v490, %v485
        %v496 = vstv %s489
        %v497 = vsel %vm492, %v496, %v487
        %s498 = sld [smem:[#allocation3 + $0x24]]
        %s499 = sld [smem:[#allocation4 + $0x24]]
        %v500 = vstv %s498
        %vm501 = vcmp.lt.f32.partialorder %v500, %v142
        %vm502 = vmxor %vm491, %vm501
        %v503 = vsel %vm502, %v490, %v493
        %v504 = vsel %vm502, %v496, %v494
        %v505 = vsel %vm502, %v500, %v495
        %v506 = vstv %s499
        %v507 = vsel %vm502, %v506, %v497
        %s508 = sld [smem:[#allocation3 + $0x25]]
        %s509 = sld [smem:[#allocation4 + $0x25]]
        %v510 = vstv %s508
        %vm511 = vcmp.lt.f32.partialorder %v510, %v142
        %vm512 = vmxor %vm501, %vm511
        %v513 = vsel %vm512, %v500, %v503
        %v514 = vsel %vm512, %v506, %v504
        %v515 = vsel %vm512, %v510, %v505
        %v516 = vstv %s509
        %v517 = vsel %vm512, %v516, %v507
        %s518 = sld [smem:[#allocation3 + $0x26]]
        %s519 = sld [smem:[#allocation4 + $0x26]]
        %v520 = vstv %s518
        %vm521 = vcmp.lt.f32.partialorder %v520, %v142
        %vm522 = vmxor %vm511, %vm521
        %v523 = vsel %vm522, %v510, %v513
        %v524 = vsel %vm522, %v516, %v514
        %v525 = vsel %vm522, %v520, %v515
        %v526 = vstv %s519
        %v527 = vsel %vm522, %v526, %v517
        %s528 = sld [smem:[#allocation3 + $0x27]]
        %s529 = sld [smem:[#allocation4 + $0x27]]
        %v530 = vstv %s528
        %vm531 = vcmp.lt.f32.partialorder %v530, %v142
        %vm532 = vmxor %vm521, %vm531
        %v533 = vsel %vm532, %v520, %v523
        %v534 = vsel %vm532, %v526, %v524
        %v535 = vsel %vm532, %v530, %v525
        %v536 = vstv %s529
        %v537 = vsel %vm532, %v536, %v527
        %s538 = sld [smem:[#allocation3 + $0x28]]
        %s539 = sld [smem:[#allocation4 + $0x28]]
        %v540 = vstv %s538
        %vm541 = vcmp.lt.f32.partialorder %v540, %v142
        %vm542 = vmxor %vm531, %vm541
        %v543 = vsel %vm542, %v530, %v533
        %v544 = vsel %vm542, %v536, %v534
        %v545 = vsel %vm542, %v540, %v535
        %v546 = vstv %s539
        %v547 = vsel %vm542, %v546, %v537
        %s548 = sld [smem:[#allocation3 + $0x29]]
        %s549 = sld [smem:[#allocation4 + $0x29]]
        %v550 = vstv %s548
        %vm551 = vcmp.lt.f32.partialorder %v550, %v142
        %vm552 = vmxor %vm541, %vm551
        %v553 = vsel %vm552, %v540, %v543
        %v554 = vsel %vm552, %v546, %v544
        %v555 = vsel %vm552, %v550, %v545
        %v556 = vstv %s549
        %v557 = vsel %vm552, %v556, %v547
        %s558 = sld [smem:[#allocation3 + $0x2a]]
        %s559 = sld [smem:[#allocation4 + $0x2a]]
        %v560 = vstv %s558
        %vm561 = vcmp.lt.f32.partialorder %v560, %v142
        %vm562 = vmxor %vm551, %vm561
        %v563 = vsel %vm562, %v550, %v553
        %v564 = vsel %vm562, %v556, %v554
        %v565 = vsel %vm562, %v560, %v555
        %v566 = vstv %s559
        %v567 = vsel %vm562, %v566, %v557
        %s568 = sld [smem:[#allocation3 + $0x2b]]
        %s569 = sld [smem:[#allocation4 + $0x2b]]
        %v570 = vstv %s568
        %vm571 = vcmp.lt.f32.partialorder %v570, %v142
        %vm572 = vmxor %vm561, %vm571
        %v573 = vsel %vm572, %v560, %v563
        %v574 = vsel %vm572, %v566, %v564
        %v575 = vsel %vm572, %v570, %v565
        %v576 = vstv %s569
        %v577 = vsel %vm572, %v576, %v567
        %s578 = sld [smem:[#allocation3 + $0x2c]]
        %s579 = sld [smem:[#allocation4 + $0x2c]]
        %v580 = vstv %s578
        %vm581 = vcmp.lt.f32.partialorder %v580, %v142
        %vm582 = vmxor %vm571, %vm581
        %v583 = vsel %vm582, %v570, %v573
        %v584 = vsel %vm582, %v576, %v574
        %v585 = vsel %vm582, %v580, %v575
        %v586 = vstv %s579
        %v587 = vsel %vm582, %v586, %v577
        %s588 = sld [smem:[#allocation3 + $0x2d]]
        %s589 = sld [smem:[#allocation4 + $0x2d]]
        %v590 = vstv %s588
        %vm591 = vcmp.lt.f32.partialorder %v590, %v142
        %vm592 = vmxor %vm581, %vm591
        %v593 = vsel %vm592, %v580, %v583
        %v594 = vsel %vm592, %v586, %v584
        %v595 = vsel %vm592, %v590, %v585
        %v596 = vstv %s589
        %v597 = vsel %vm592, %v596, %v587
        %s598 = sld [smem:[#allocation3 + $0x2e]]
        %s599 = sld [smem:[#allocation4 + $0x2e]]
        %v600 = vstv %s598
        %vm601 = vcmp.lt.f32.partialorder %v600, %v142
        %vm602 = vmxor %vm591, %vm601
        %v603 = vsel %vm602, %v590, %v593
        %v604 = vsel %vm602, %v596, %v594
        %v605 = vsel %vm602, %v600, %v595
        %v606 = vstv %s599
        %v607 = vsel %vm602, %v606, %v597
        %s608 = sld [smem:[#allocation3 + $0x2f]]
        %s609 = sld [smem:[#allocation4 + $0x2f]]
        %v610 = vstv %s608
        %vm611 = vcmp.lt.f32.partialorder %v610, %v142
        %vm612 = vmxor %vm601, %vm611
        %v613 = vsel %vm612, %v600, %v603
        %v614 = vsel %vm612, %v606, %v604
        %v615 = vsel %vm612, %v610, %v605
        %v616 = vstv %s609
        %v617 = vsel %vm612, %v616, %v607
        %s618 = sld [smem:[#allocation3 + $0x30]]
        %s619 = sld [smem:[#allocation4 + $0x30]]
        %v620 = vstv %s618
        %vm621 = vcmp.lt.f32.partialorder %v620, %v142
        %vm622 = vmxor %vm611, %vm621
        %v623 = vsel %vm622, %v610, %v613
        %v624 = vsel %vm622, %v616, %v614
        %v625 = vsel %vm622, %v620, %v615
        %v626 = vstv %s619
        %v627 = vsel %vm622, %v626, %v617
        %s628 = sld [smem:[#allocation3 + $0x31]]
        %s629 = sld [smem:[#allocation4 + $0x31]]
        %v630 = vstv %s628
        %vm631 = vcmp.lt.f32.partialorder %v630, %v142
        %vm632 = vmxor %vm621, %vm631
        %v633 = vsel %vm632, %v620, %v623
        %v634 = vsel %vm632, %v626, %v624
        %v635 = vsel %vm632, %v630, %v625
        %v636 = vstv %s629
        %v637 = vsel %vm632, %v636, %v627
        %s638 = sld [smem:[#allocation3 + $0x32]]
        %s639 = sld [smem:[#allocation4 + $0x32]]
        %v640 = vstv %s638
        %vm641 = vcmp.lt.f32.partialorder %v640, %v142
        %vm642 = vmxor %vm631, %vm641
        %v643 = vsel %vm642, %v630, %v633
        %v644 = vsel %vm642, %v636, %v634
        %v645 = vsel %vm642, %v640, %v635
        %v646 = vstv %s639
        %v647 = vsel %vm642, %v646, %v637
        %s648 = sld [smem:[#allocation3 + $0x33]]
        %s649 = sld [smem:[#allocation4 + $0x33]]
        %v650 = vstv %s648
        %vm651 = vcmp.lt.f32.partialorder %v650, %v142
        %vm652 = vmxor %vm641, %vm651
        %v653 = vsel %vm652, %v640, %v643
        %v654 = vsel %vm652, %v646, %v644
        %v655 = vsel %vm652, %v650, %v645
        %v656 = vstv %s649
        %v657 = vsel %vm652, %v656, %v647
        %s658 = sld [smem:[#allocation3 + $0x34]]
        %s659 = sld [smem:[#allocation4 + $0x34]]
        %v660 = vstv %s658
        %vm661 = vcmp.lt.f32.partialorder %v660, %v142
        %vm662 = vmxor %vm651, %vm661
        %v663 = vsel %vm662, %v650, %v653
        %v664 = vsel %vm662, %v656, %v654
        %v665 = vsel %vm662, %v660, %v655
        %v666 = vstv %s659
        %v667 = vsel %vm662, %v666, %v657
        %v668 = vsub.f32 %v142, %v663
        %v669 = vsub.f32 %v665, %v142
        %v670 = vmul.f32 %v664, %v668
        %v671 = vmul.f32 %v667, %v669
        %v672 = vadd.f32 %v670, %v671
        %v673 = vadd.f32 %v668, %v669
        %v674 = vrcp.pop %v673
        %v675 = vmul.f32 %v672, %v674
        %v676 = vmin.f32 %v675, %v667
        %v677 = vmax.f32 %v664, %v676
        %v678 = vmul.f32 %v677, 0.0026041667
        %vm679 = vcmp.gt.f32.partialorder %v142, -2.7300763
        %vm680 = vcmp.lt.f32.partialorder %v142, 2.688504
        %vm681 = vmand %vm679, %vm680
        %vm682 = vcmp.ge.f32.partialorder %v142, 2.688504
        %v683 = vsel %vm682, 1.0, 0.0
        %v684 = vsel %vm681, %v678, %v683
        %685 = vst [vmem:[%s141] sm:$0xff] %v684
        %s686 = sand.u32 %s62, 1
        %s687 = scalar_lea.sflag [#allocation7], %s686
        %s688 = sand.u32 %s62, 1
        %s689 = smul.addr %s688, 8
        %s690 = scalar_lea.vmem [#allocation8], %s689
        // Predicated region
        $region29: #{tpu_custom_call.1} parent=23 // pred_check
          %p691 = pneg %p72
        $region30: #{tpu_custom_call.1} parent=23 // pred_check_branch
          %693 = sbr.rel (%p691) target = $region32
        $region31: #{tpu_custom_call.1} parent=23 // pred_region
          %s695 = ssub.s32 128, 128
          %696 = vsyncadd %s687, %s695
          %s697 = smul.addr %s28, 128
          %s698 = scalar_lea.hbm %s3, %s697
          %s700 = sshll.u32 %s690, 4
          %s701 = int_to_ptr.vmem [resolvable:$true] %s700
          %703 = dma.vmem_to_hbm [thread:$0]  %s701, 128, %s698, %s687
        $region32: #{tpu_custom_call.1} parent=23 // pred_fallthru
          _
      $region24: #{tpu_custom_call.1} parent=5 // pred_fallthru
        _
      %p704 = scmp.le.s32.totalorder 2, %s23
      // Predicated region
      $region33: #{tpu_custom_call.1} parent=5 // pred_check
        %p705 = pneg %p704
      $region34: #{tpu_custom_call.1} parent=5 // pred_check_branch
        %707 = sbr.rel (%p705) target = $region36
      $region35: #{tpu_custom_call.1} parent=5 // pred_region
        %s708 = ssub.s32 %s23, 2
        // Predicated region
        $region37: #{tpu_custom_call.1} parent=35 // pred_check
          %p709 = pneg %p78
        $region38: #{tpu_custom_call.1} parent=35 // pred_check_branch
          %711 = sbr.rel (%p709) target = $region40
        $region39: #{tpu_custom_call.1} parent=35 // pred_region
          %s712 = sand.u32 %s63, 1
          %s713 = scalar_lea.sflag [#allocation7], %s712
          %s714 = sand.u32 %s63, 1
          %s715 = smul.addr %s714, 8
          %s716 = scalar_lea.vmem [#allocation8], %s715
          %717 = dma.done %s713, 128
        $region40: #{tpu_custom_call.1} parent=35 // pred_fallthru
          _
      $region36: #{tpu_custom_call.1} parent=5 // pred_fallthru
        _
    $region6: #{tpu_custom_call.1} parent=1 // loop_footer
      %s27 = sadd.s32 1, %s23
    $region7: #{tpu_custom_call.1} parent=1 // loop_footer_branch
      %22 = sbr.rel target = $region3
    $region8: #{tpu_custom_call.1} parent=1 // loop_exit
      _
    %718 = vsyncpa [#allocation6], 1
    %s719 = scalar_lea.sflag [#allocation6], 1
    %720 = vsyncpa %s719, 1
    %721 = vsyncpa [#allocation7], 1
    %s722 = scalar_lea.sflag [#allocation7], 1
    %723 = vsyncpa %s722, 1

</llo_original>
